<compile_context>
chip_gen: v7x
topology: tpu7x:2x2x1
jax: 0.10.0
libtpu: 0.0.40
codegen_flags: <defaults>
</compile_context>

<pallas_src>
import functools

import jax
import jax.numpy as jnp
from jax.experimental import pallas as pl
from jax.experimental.pallas import tpu as pltpu


def _fbpnet_kernel(b_ref, w_ref, bout_ref, x_ref, c_ref, bp_ref, out_ref, lhs_ref, *,
                   batch, n_angles, n_det, n_fbps):
    B, A, D, F = batch, n_angles, n_det, n_fbps

    # (1) Filter step: ONE MXU matmul with all F per-FBP filters folded into N.
    #     y[a*B + b, f*D + d] = sum_e x[b, a, e] * C_f[e, d]
    y = jnp.dot(x_ref[...], c_ref[...],
                preferred_element_type=jnp.float32)               # [A*B, F*D] f32

    # (2) Block-transpose the (angle, fbp) grid of [B, D] blocks so the backprojection
    #     becomes a single matmul with M = F*B and fused K = A*D:
    #       lhs[f*B + b, a*D + d] = y[a*B + b, f*D + d]
    #     Implemented with static value slices + masked stores into a VMEM scratch
    #     (only well-supported ops; no general reshape/transpose in-kernel).
    for a in range(A):
        ya = y[a * B:(a + 1) * B, :]                              # [B, F*D]
        for f in range(F):
            lhs_ref[f * B:(f + 1) * B, a * D:(a + 1) * D] = ya[:, f * D:(f + 1) * D]

    # (3) Backprojection: ONE MXU matmul, bf16 operands, f32 accumulation,
    #     lane-dense N = HW.
    img = jnp.dot(lhs_ref[...].astype(jnp.bfloat16), bp_ref[...],
                  preferred_element_type=jnp.float32)             # [F*B, HW] f32

    # (4) VPU epilogue in f32: relu(fbp_f(x) + b_f), weighted sum over f, relu(+bout).
    acc = jnp.maximum(img[0:B, :] + b_ref[0], 0.0) * w_ref[0]
    for f in range(1, F):
        w_f = w_ref[f]
        b_f = b_ref[f]
        acc = acc + jnp.maximum(img[f * B:(f + 1) * B, :] + b_f, 0.0) * w_f
    out_ref[...] = jnp.maximum(acc + bout_ref[0], 0.0)


def fbpnet_forward(x, filters, bp, b, weights, bout, H, W):
    B, A, D = x.shape
    F = filters.shape[0]
    HW = H * W
    assert bp.shape == (A, D, HW)

    # Layout plumbing on the XLA side (free for the kernel):
    #   xab : [A*B, D]   filter-matmul LHS, rows ordered (angle, batch)
    #   cc  : [D, F*D]   all FBP filter matrices concatenated along N
    #   bp2 : [A*D, HW]  backprojection operator with fused (angle, detector) K
    # bf16 matmul inputs halve HBM traffic; accumulation stays f32 inside the kernel.
    xab = jnp.transpose(x, (1, 0, 2)).reshape(A * B, D).astype(jnp.bfloat16)
    cc = jnp.transpose(filters, (1, 0, 2)).reshape(D, F * D).astype(jnp.bfloat16)
    bp2 = bp.reshape(A * D, HW).astype(jnp.bfloat16)

    flops = 2 * (A * B) * D * (F * D) + 2 * (F * B) * (A * D) * HW
    bytes_accessed = 2 * (xab.size + cc.size + bp2.size) + 4 * (2 * F + 1 + B * HW)

    kernel = functools.partial(
        _fbpnet_kernel, batch=B, n_angles=A, n_det=D, n_fbps=F)

    out = pl.pallas_call(
        kernel,
        out_shape=jax.ShapeDtypeStruct((B, HW), jnp.float32),
        grid=(1,),
        in_specs=[
            pl.BlockSpec(memory_space=pltpu.SMEM),           # b        [F]
            pl.BlockSpec(memory_space=pltpu.SMEM),           # weights  [F]
            pl.BlockSpec(memory_space=pltpu.SMEM),           # bout     [1]
            pl.BlockSpec((A * B, D), lambda i: (0, 0)),       # xab
            pl.BlockSpec((D, F * D), lambda i: (0, 0)),       # cc (filters)
            pl.BlockSpec((A * D, HW), lambda i: (0, 0)),      # bp2
        ],
        out_specs=pl.BlockSpec((B, HW), lambda i: (0, 0)),
        scratch_shapes=[pltpu.VMEM((F * B, A * D), jnp.float32)],
        compiler_params=pltpu.CompilerParams(
            dimension_semantics=("arbitrary",)),
        cost_estimate=pl.CostEstimate(
            flops=flops, transcendentals=0, bytes_accessed=bytes_accessed),
    )(b, weights, bout, xab, cc, bp2)
    return out.reshape(B, H, W)


def fbpnet_reference(x, filters, bp, b, weights, bout, H, W,
                     matmul_dtype=jnp.float32):
    """Pure-JAX reference mirroring the PyTorch forward.

    `matmul_dtype` controls the precision of the matmul operands (accumulation is
    always f32), so the reference can be matched to the kernel's bf16 MXU inputs.
    """
    xc = x.astype(matmul_dtype)
    fc = filters.astype(matmul_dtype)
    bpc = bp.astype(matmul_dtype)
    filt = jnp.einsum('bae,fed->fbad', xc, fc,
                      preferred_element_type=jnp.float32)             # [F,B,A,D]
    imgs = jnp.einsum('fbad,adh->fbh', filt.astype(matmul_dtype), bpc,
                      preferred_element_type=jnp.float32)             # [F,B,HW]
    constructs = jax.nn.relu(imgs + b[:, None, None])                 # relu(fbp + b_f)
    out = jnp.sum(constructs * weights[:, None, None], axis=0)        # weighted sum
    out = jax.nn.relu(out + bout[0])
    return out.reshape(x.shape[0], H, W)


if __name__ == "__main__":
    # Small, deterministic synthetic setup.
    B, A, D = 2, 8, 128          # batch, n_angles, n_detectors (sinogram)
    H, W = 16, 16                # reconstructed image size
    n_fbps = 8

    key = jax.random.PRNGKey(0)
    kx, kc, kbp, kb, kw, kbo = jax.random.split(key, 6)

    x = jax.random.normal(kx, (B, A, D), dtype=jnp.float32)
    # Per-FBP detector filter matrices (stand-in for learned ramp filters).
    filters = 0.05 * jax.random.normal(kc, (n_fbps, D, D), dtype=jnp.float32)
    # Shared geometric backprojection operator (stand-in for geometry.BP).
    bp = 0.05 * jax.random.normal(kbp, (A, D, H * W), dtype=jnp.float32)
    # torch.randn(1) per-FBP biases, torch.randn(n_fbps) weights, torch.randn(1) bout.
    b = jax.random.normal(kb, (n_fbps,), dtype=jnp.float32)
    weights = jax.random.normal(kw, (n_fbps,), dtype=jnp.float32)
    bout = jax.random.normal(kbo, (1,), dtype=jnp.float32)

    out = fbpnet_forward(x, filters, bp, b, weights, bout, H, W)
    out = jax.block_until_ready(out)

    # Validate against a reference at matched matmul precision (bf16 operands,
    # f32 accumulation) so only reassociation-level differences remain.
    ref = fbpnet_reference(x, filters, bp, b, weights, bout, H, W,
                           matmul_dtype=jnp.bfloat16)
    assert out.shape == (B, H, W), out.shape
    assert jnp.allclose(out, ref, atol=2e-3, rtol=2e-3), \
        float(jnp.max(jnp.abs(out - ref)))

    print("KERNEL_OK")
</pallas_src>

<mosaic_0001>
module attributes {stable_mosaic.version = 11 : i64} {
  func.func @_fbpnet_kernel(%arg0: i32, %arg1: memref<8xf32, #tpu.memory_space<smem>>, %arg2: memref<8xf32, #tpu.memory_space<smem>>, %arg3: memref<1xf32, #tpu.memory_space<smem>>, %arg4: memref<16x128xbf16, #tpu.memory_space<vmem>>, %arg5: memref<128x1024xbf16, #tpu.memory_space<vmem>>, %arg6: memref<1024x256xbf16, #tpu.memory_space<vmem>>, %arg7: memref<2x256xf32, #tpu.memory_space<vmem>>, %arg8: memref<16x1024xf32, #tpu.memory_space<vmem>>) attributes {dimension_semantics = [#tpu.dimension_semantics<arbitrary>], iteration_bounds = array<i64: 1>, scalar_prefetch = 0 : i64, scratch_operands = 1 : i64, tpu.core_type = #tpu.core_type<tc>, window_params = [{transform_indices = @transform_0, window_bounds = array<i64: 8>}, {transform_indices = @transform_1, window_bounds = array<i64: 8>}, {transform_indices = @transform_2, window_bounds = array<i64: 1>}, {pipeline_mode = #tpu.pipeline_mode<synchronous>, transform_indices = @transform_3, window_bounds = array<i64: 16, 128>}, {pipeline_mode = #tpu.pipeline_mode<synchronous>, transform_indices = @transform_4, window_bounds = array<i64: 128, 1024>}, {pipeline_mode = #tpu.pipeline_mode<synchronous>, transform_indices = @transform_5, window_bounds = array<i64: 1024, 256>}, {pipeline_mode = #tpu.pipeline_mode<synchronous>, transform_indices = @transform_6, window_bounds = array<i64: 2, 256>}]} {
    %c0 = arith.constant 0 : index
    %c0_0 = arith.constant 0 : index
    %0 = vector.load %arg4[%c0, %c0_0] : memref<16x128xbf16, #tpu.memory_space<vmem>>, vector<16x128xbf16>
    %c0_1 = arith.constant 0 : index
    %c0_2 = arith.constant 0 : index
    %1 = vector.load %arg5[%c0_1, %c0_2] : memref<128x1024xbf16, #tpu.memory_space<vmem>>, vector<128x1024xbf16>
    %cst = arith.constant dense<0.000000e+00> : vector<16x1024xf32>
    %2 = tpu.matmul %0, %1, %cst {dimension_numbers = #tpu.dot_dimension_numbers<[1], [0], [0], [1], [0, 0, 1, 1], [], []>} : vector<16x128xbf16>, vector<128x1024xbf16>, vector<16x1024xf32> -> vector<16x1024xf32>
    %3 = vector.extract_strided_slice %2 {offsets = [0, 0], sizes = [2, 1024], strides = [1, 1]} : vector<16x1024xf32> to vector<2x1024xf32>
    %4 = vector.extract_strided_slice %3 {offsets = [0, 0], sizes = [2, 128], strides = [1, 1]} : vector<2x1024xf32> to vector<2x128xf32>
    %c0_3 = arith.constant 0 : index
    %c0_4 = arith.constant 0 : index
    %5 = vector.load %arg8[%c0_3, %c0_4] : memref<16x1024xf32, #tpu.memory_space<vmem>>, vector<2x128xf32>
    tpu.vector_store %arg8[%c0_3, %c0_4], %4 {strides = array<i32>} : memref<16x1024xf32, #tpu.memory_space<vmem>>, vector<2x128xf32>,
    %6 = vector.extract_strided_slice %3 {offsets = [0, 128], sizes = [2, 128], strides = [1, 1]} : vector<2x1024xf32> to vector<2x128xf32>
    %c2 = arith.constant 2 : index
    %c0_5 = arith.constant 0 : index
    %7 = vector.load %arg8[%c2, %c0_5] : memref<16x1024xf32, #tpu.memory_space<vmem>>, vector<2x128xf32>
    tpu.vector_store %arg8[%c2, %c0_5], %6 {strides = array<i32>} : memref<16x1024xf32, #tpu.memory_space<vmem>>, vector<2x128xf32>,
    %8 = vector.extract_strided_slice %3 {offsets = [0, 256], sizes = [2, 128], strides = [1, 1]} : vector<2x1024xf32> to vector<2x128xf32>
    %c4 = arith.constant 4 : index
    %c0_6 = arith.constant 0 : index
    %9 = vector.load %arg8[%c4, %c0_6] : memref<16x1024xf32, #tpu.memory_space<vmem>>, vector<2x128xf32>
    tpu.vector_store %arg8[%c4, %c0_6], %8 {strides = array<i32>} : memref<16x1024xf32, #tpu.memory_space<vmem>>, vector<2x128xf32>,
    %10 = vector.extract_strided_slice %3 {offsets = [0, 384], sizes = [2, 128], strides = [1, 1]} : vector<2x1024xf32> to vector<2x128xf32>
    %c6 = arith.constant 6 : index
    %c0_7 = arith.constant 0 : index
    %11 = vector.load %arg8[%c6, %c0_7] : memref<16x1024xf32, #tpu.memory_space<vmem>>, vector<2x128xf32>
    tpu.vector_store %arg8[%c6, %c0_7], %10 {strides = array<i32>} : memref<16x1024xf32, #tpu.memory_space<vmem>>, vector<2x128xf32>,
    %12 = vector.extract_strided_slice %3 {offsets = [0, 512], sizes = [2, 128], strides = [1, 1]} : vector<2x1024xf32> to vector<2x128xf32>
    %c8 = arith.constant 8 : index
    %c0_8 = arith.constant 0 : index
    %13 = vector.load %arg8[%c8, %c0_8] : memref<16x1024xf32, #tpu.memory_space<vmem>>, vector<2x128xf32>
    tpu.vector_store %arg8[%c8, %c0_8], %12 {strides = array<i32>} : memref<16x1024xf32, #tpu.memory_space<vmem>>, vector<2x128xf32>,
    %14 = vector.extract_strided_slice %3 {offsets = [0, 640], sizes = [2, 128], strides = [1, 1]} : vector<2x1024xf32> to vector<2x128xf32>
    %c10 = arith.constant 10 : index
    %c0_9 = arith.constant 0 : index
    %15 = vector.load %arg8[%c10, %c0_9] : memref<16x1024xf32, #tpu.memory_space<vmem>>, vector<2x128xf32>
    tpu.vector_store %arg8[%c10, %c0_9], %14 {strides = array<i32>} : memref<16x1024xf32, #tpu.memory_space<vmem>>, vector<2x128xf32>,
    %16 = vector.extract_strided_slice %3 {offsets = [0, 768], sizes = [2, 128], strides = [1, 1]} : vector<2x1024xf32> to vector<2x128xf32>
    %c12 = arith.constant 12 : index
    %c0_10 = arith.constant 0 : index
    %17 = vector.load %arg8[%c12, %c0_10] : memref<16x1024xf32, #tpu.memory_space<vmem>>, vector<2x128xf32>
    tpu.vector_store %arg8[%c12, %c0_10], %16 {strides = array<i32>} : memref<16x1024xf32, #tpu.memory_space<vmem>>, vector<2x128xf32>,
    %18 = vector.extract_strided_slice %3 {offsets = [0, 896], sizes = [2, 128], strides = [1, 1]} : vector<2x1024xf32> to vector<2x128xf32>
    %c14 = arith.constant 14 : index
    %c0_11 = arith.constant 0 : index
    %19 = vector.load %arg8[%c14, %c0_11] : memref<16x1024xf32, #tpu.memory_space<vmem>>, vector<2x128xf32>
    tpu.vector_store %arg8[%c14, %c0_11], %18 {strides = array<i32>} : memref<16x1024xf32, #tpu.memory_space<vmem>>, vector<2x128xf32>,
    %20 = vector.extract_strided_slice %2 {offsets = [2, 0], sizes = [2, 1024], strides = [1, 1]} : vector<16x1024xf32> to vector<2x1024xf32>
    %21 = vector.extract_strided_slice %20 {offsets = [0, 0], sizes = [2, 128], strides = [1, 1]} : vector<2x1024xf32> to vector<2x128xf32>
    %c0_12 = arith.constant 0 : index
    %c128 = arith.constant 128 : index
    %22 = vector.load %arg8[%c0_12, %c128] : memref<16x1024xf32, #tpu.memory_space<vmem>>, vector<2x128xf32>
    tpu.vector_store %arg8[%c0_12, %c128], %21 {strides = array<i32>} : memref<16x1024xf32, #tpu.memory_space<vmem>>, vector<2x128xf32>,
    %23 = vector.extract_strided_slice %20 {offsets = [0, 128], sizes = [2, 128], strides = [1, 1]} : vector<2x1024xf32> to vector<2x128xf32>
    %c2_13 = arith.constant 2 : index
    %c128_14 = arith.constant 128 : index
    %24 = vector.load %arg8[%c2_13, %c128_14] : memref<16x1024xf32, #tpu.memory_space<vmem>>, vector<2x128xf32>
    tpu.vector_store %arg8[%c2_13, %c128_14], %23 {strides = array<i32>} : memref<16x1024xf32, #tpu.memory_space<vmem>>, vector<2x128xf32>,
    %25 = vector.extract_strided_slice %20 {offsets = [0, 256], sizes = [2, 128], strides = [1, 1]} : vector<2x1024xf32> to vector<2x128xf32>
    %c4_15 = arith.constant 4 : index
    %c128_16 = arith.constant 128 : index
    %26 = vector.load %arg8[%c4_15, %c128_16] : memref<16x1024xf32, #tpu.memory_space<vmem>>, vector<2x128xf32>
    tpu.vector_store %arg8[%c4_15, %c128_16], %25 {strides = array<i32>} : memref<16x1024xf32, #tpu.memory_space<vmem>>, vector<2x128xf32>,
    %27 = vector.extract_strided_slice %20 {offsets = [0, 384], sizes = [2, 128], strides = [1, 1]} : vector<2x1024xf32> to vector<2x128xf32>
    %c6_17 = arith.constant 6 : index
    %c128_18 = arith.constant 128 : index
    %28 = vector.load %arg8[%c6_17, %c128_18] : memref<16x1024xf32, #tpu.memory_space<vmem>>, vector<2x128xf32>
    tpu.vector_store %arg8[%c6_17, %c128_18], %27 {strides = array<i32>} : memref<16x1024xf32, #tpu.memory_space<vmem>>, vector<2x128xf32>,
    %29 = vector.extract_strided_slice %20 {offsets = [0, 512], sizes = [2, 128], strides = [1, 1]} : vector<2x1024xf32> to vector<2x128xf32>
    %c8_19 = arith.constant 8 : index
    %c128_20 = arith.constant 128 : index
    %30 = vector.load %arg8[%c8_19, %c128_20] : memref<16x1024xf32, #tpu.memory_space<vmem>>, vector<2x128xf32>
    tpu.vector_store %arg8[%c8_19, %c128_20], %29 {strides = array<i32>} : memref<16x1024xf32, #tpu.memory_space<vmem>>, vector<2x128xf32>,
    %31 = vector.extract_strided_slice %20 {offsets = [0, 640], sizes = [2, 128], strides = [1, 1]} : vector<2x1024xf32> to vector<2x128xf32>
    %c10_21 = arith.constant 10 : index
    %c128_22 = arith.constant 128 : index
    %32 = vector.load %arg8[%c10_21, %c128_22] : memref<16x1024xf32, #tpu.memory_space<vmem>>, vector<2x128xf32>
    tpu.vector_store %arg8[%c10_21, %c128_22], %31 {strides = array<i32>} : memref<16x1024xf32, #tpu.memory_space<vmem>>, vector<2x128xf32>,
    %33 = vector.extract_strided_slice %20 {offsets = [0, 768], sizes = [2, 128], strides = [1, 1]} : vector<2x1024xf32> to vector<2x128xf32>
    %c12_23 = arith.constant 12 : index
    %c128_24 = arith.constant 128 : index
    %34 = vector.load %arg8[%c12_23, %c128_24] : memref<16x1024xf32, #tpu.memory_space<vmem>>, vector<2x128xf32>
    tpu.vector_store %arg8[%c12_23, %c128_24], %33 {strides = array<i32>} : memref<16x1024xf32, #tpu.memory_space<vmem>>, vector<2x128xf32>,
    %35 = vector.extract_strided_slice %20 {offsets = [0, 896], sizes = [2, 128], strides = [1, 1]} : vector<2x1024xf32> to vector<2x128xf32>
    %c14_25 = arith.constant 14 : index
    %c128_26 = arith.constant 128 : index
    %36 = vector.load %arg8[%c14_25, %c128_26] : memref<16x1024xf32, #tpu.memory_space<vmem>>, vector<2x128xf32>
    tpu.vector_store %arg8[%c14_25, %c128_26], %35 {strides = array<i32>} : memref<16x1024xf32, #tpu.memory_space<vmem>>, vector<2x128xf32>,
    %37 = vector.extract_strided_slice %2 {offsets = [4, 0], sizes = [2, 1024], strides = [1, 1]} : vector<16x1024xf32> to vector<2x1024xf32>
    %38 = vector.extract_strided_slice %37 {offsets = [0, 0], sizes = [2, 128], strides = [1, 1]} : vector<2x1024xf32> to vector<2x128xf32>
    %c0_27 = arith.constant 0 : index
    %c256 = arith.constant 256 : index
    %39 = vector.load %arg8[%c0_27, %c256] : memref<16x1024xf32, #tpu.memory_space<vmem>>, vector<2x128xf32>
    tpu.vector_store %arg8[%c0_27, %c256], %38 {strides = array<i32>} : memref<16x1024xf32, #tpu.memory_space<vmem>>, vector<2x128xf32>,
    %40 = vector.extract_strided_slice %37 {offsets = [0, 128], sizes = [2, 128], strides = [1, 1]} : vector<2x1024xf32> to vector<2x128xf32>
    %c2_28 = arith.constant 2 : index
    %c256_29 = arith.constant 256 : index
    %41 = vector.load %arg8[%c2_28, %c256_29] : memref<16x1024xf32, #tpu.memory_space<vmem>>, vector<2x128xf32>
    tpu.vector_store %arg8[%c2_28, %c256_29], %40 {strides = array<i32>} : memref<16x1024xf32, #tpu.memory_space<vmem>>, vector<2x128xf32>,
    %42 = vector.extract_strided_slice %37 {offsets = [0, 256], sizes = [2, 128], strides = [1, 1]} : vector<2x1024xf32> to vector<2x128xf32>
    %c4_30 = arith.constant 4 : index
    %c256_31 = arith.constant 256 : index
    %43 = vector.load %arg8[%c4_30, %c256_31] : memref<16x1024xf32, #tpu.memory_space<vmem>>, vector<2x128xf32>
    tpu.vector_store %arg8[%c4_30, %c256_31], %42 {strides = array<i32>} : memref<16x1024xf32, #tpu.memory_space<vmem>>, vector<2x128xf32>,
    %44 = vector.extract_strided_slice %37 {offsets = [0, 384], sizes = [2, 128], strides = [1, 1]} : vector<2x1024xf32> to vector<2x128xf32>
    %c6_32 = arith.constant 6 : index
    %c256_33 = arith.constant 256 : index
    %45 = vector.load %arg8[%c6_32, %c256_33] : memref<16x1024xf32, #tpu.memory_space<vmem>>, vector<2x128xf32>
    tpu.vector_store %arg8[%c6_32, %c256_33], %44 {strides = array<i32>} : memref<16x1024xf32, #tpu.memory_space<vmem>>, vector<2x128xf32>,
    %46 = vector.extract_strided_slice %37 {offsets = [0, 512], sizes = [2, 128], strides = [1, 1]} : vector<2x1024xf32> to vector<2x128xf32>
    %c8_34 = arith.constant 8 : index
    %c256_35 = arith.constant 256 : index
    %47 = vector.load %arg8[%c8_34, %c256_35] : memref<16x1024xf32, #tpu.memory_space<vmem>>, vector<2x128xf32>
    tpu.vector_store %arg8[%c8_34, %c256_35], %46 {strides = array<i32>} : memref<16x1024xf32, #tpu.memory_space<vmem>>, vector<2x128xf32>,
    %48 = vector.extract_strided_slice %37 {offsets = [0, 640], sizes = [2, 128], strides = [1, 1]} : vector<2x1024xf32> to vector<2x128xf32>
    %c10_36 = arith.constant 10 : index
    %c256_37 = arith.constant 256 : index
    %49 = vector.load %arg8[%c10_36, %c256_37] : memref<16x1024xf32, #tpu.memory_space<vmem>>, vector<2x128xf32>
    tpu.vector_store %arg8[%c10_36, %c256_37], %48 {strides = array<i32>} : memref<16x1024xf32, #tpu.memory_space<vmem>>, vector<2x128xf32>,
    %50 = vector.extract_strided_slice %37 {offsets = [0, 768], sizes = [2, 128], strides = [1, 1]} : vector<2x1024xf32> to vector<2x128xf32>
    %c12_38 = arith.constant 12 : index
    %c256_39 = arith.constant 256 : index
    %51 = vector.load %arg8[%c12_38, %c256_39] : memref<16x1024xf32, #tpu.memory_space<vmem>>, vector<2x128xf32>
    tpu.vector_store %arg8[%c12_38, %c256_39], %50 {strides = array<i32>} : memref<16x1024xf32, #tpu.memory_space<vmem>>, vector<2x128xf32>,
    %52 = vector.extract_strided_slice %37 {offsets = [0, 896], sizes = [2, 128], strides = [1, 1]} : vector<2x1024xf32> to vector<2x128xf32>
    %c14_40 = arith.constant 14 : index
    %c256_41 = arith.constant 256 : index
    %53 = vector.load %arg8[%c14_40, %c256_41] : memref<16x1024xf32, #tpu.memory_space<vmem>>, vector<2x128xf32>
    tpu.vector_store %arg8[%c14_40, %c256_41], %52 {strides = array<i32>} : memref<16x1024xf32, #tpu.memory_space<vmem>>, vector<2x128xf32>,
    %54 = vector.extract_strided_slice %2 {offsets = [6, 0], sizes = [2, 1024], strides = [1, 1]} : vector<16x1024xf32> to vector<2x1024xf32>
    %55 = vector.extract_strided_slice %54 {offsets = [0, 0], sizes = [2, 128], strides = [1, 1]} : vector<2x1024xf32> to vector<2x128xf32>
    %c0_42 = arith.constant 0 : index
    %c384 = arith.constant 384 : index
    %56 = vector.load %arg8[%c0_42, %c384] : memref<16x1024xf32, #tpu.memory_space<vmem>>, vector<2x128xf32>
    tpu.vector_store %arg8[%c0_42, %c384], %55 {strides = array<i32>} : memref<16x1024xf32, #tpu.memory_space<vmem>>, vector<2x128xf32>,
    %57 = vector.extract_strided_slice %54 {offsets = [0, 128], sizes = [2, 128], strides = [1, 1]} : vector<2x1024xf32> to vector<2x128xf32>
    %c2_43 = arith.constant 2 : index
    %c384_44 = arith.constant 384 : index
    %58 = vector.load %arg8[%c2_43, %c384_44] : memref<16x1024xf32, #tpu.memory_space<vmem>>, vector<2x128xf32>
    tpu.vector_store %arg8[%c2_43, %c384_44], %57 {strides = array<i32>} : memref<16x1024xf32, #tpu.memory_space<vmem>>, vector<2x128xf32>,
    %59 = vector.extract_strided_slice %54 {offsets = [0, 256], sizes = [2, 128], strides = [1, 1]} : vector<2x1024xf32> to vector<2x128xf32>
    %c4_45 = arith.constant 4 : index
    %c384_46 = arith.constant 384 : index
    %60 = vector.load %arg8[%c4_45, %c384_46] : memref<16x1024xf32, #tpu.memory_space<vmem>>, vector<2x128xf32>
    tpu.vector_store %arg8[%c4_45, %c384_46], %59 {strides = array<i32>} : memref<16x1024xf32, #tpu.memory_space<vmem>>, vector<2x128xf32>,
    %61 = vector.extract_strided_slice %54 {offsets = [0, 384], sizes = [2, 128], strides = [1, 1]} : vector<2x1024xf32> to vector<2x128xf32>
    %c6_47 = arith.constant 6 : index
    %c384_48 = arith.constant 384 : index
    %62 = vector.load %arg8[%c6_47, %c384_48] : memref<16x1024xf32, #tpu.memory_space<vmem>>, vector<2x128xf32>
    tpu.vector_store %arg8[%c6_47, %c384_48], %61 {strides = array<i32>} : memref<16x1024xf32, #tpu.memory_space<vmem>>, vector<2x128xf32>,
    %63 = vector.extract_strided_slice %54 {offsets = [0, 512], sizes = [2, 128], strides = [1, 1]} : vector<2x1024xf32> to vector<2x128xf32>
    %c8_49 = arith.constant 8 : index
    %c384_50 = arith.constant 384 : index
    %64 = vector.load %arg8[%c8_49, %c384_50] : memref<16x1024xf32, #tpu.memory_space<vmem>>, vector<2x128xf32>
    tpu.vector_store %arg8[%c8_49, %c384_50], %63 {strides = array<i32>} : memref<16x1024xf32, #tpu.memory_space<vmem>>, vector<2x128xf32>,
    %65 = vector.extract_strided_slice %54 {offsets = [0, 640], sizes = [2, 128], strides = [1, 1]} : vector<2x1024xf32> to vector<2x128xf32>
    %c10_51 = arith.constant 10 : index
    %c384_52 = arith.constant 384 : index
    %66 = vector.load %arg8[%c10_51, %c384_52] : memref<16x1024xf32, #tpu.memory_space<vmem>>, vector<2x128xf32>
    tpu.vector_store %arg8[%c10_51, %c384_52], %65 {strides = array<i32>} : memref<16x1024xf32, #tpu.memory_space<vmem>>, vector<2x128xf32>,
    %67 = vector.extract_strided_slice %54 {offsets = [0, 768], sizes = [2, 128], strides = [1, 1]} : vector<2x1024xf32> to vector<2x128xf32>
    %c12_53 = arith.constant 12 : index
    %c384_54 = arith.constant 384 : index
    %68 = vector.load %arg8[%c12_53, %c384_54] : memref<16x1024xf32, #tpu.memory_space<vmem>>, vector<2x128xf32>
    tpu.vector_store %arg8[%c12_53, %c384_54], %67 {strides = array<i32>} : memref<16x1024xf32, #tpu.memory_space<vmem>>, vector<2x128xf32>,
    %69 = vector.extract_strided_slice %54 {offsets = [0, 896], sizes = [2, 128], strides = [1, 1]} : vector<2x1024xf32> to vector<2x128xf32>
    %c14_55 = arith.constant 14 : index
    %c384_56 = arith.constant 384 : index
    %70 = vector.load %arg8[%c14_55, %c384_56] : memref<16x1024xf32, #tpu.memory_space<vmem>>, vector<2x128xf32>
    tpu.vector_store %arg8[%c14_55, %c384_56], %69 {strides = array<i32>} : memref<16x1024xf32, #tpu.memory_space<vmem>>, vector<2x128xf32>,
    %71 = vector.extract_strided_slice %2 {offsets = [8, 0], sizes = [2, 1024], strides = [1, 1]} : vector<16x1024xf32> to vector<2x1024xf32>
    %72 = vector.extract_strided_slice %71 {offsets = [0, 0], sizes = [2, 128], strides = [1, 1]} : vector<2x1024xf32> to vector<2x128xf32>
    %c0_57 = arith.constant 0 : index
    %c512 = arith.constant 512 : index
    %73 = vector.load %arg8[%c0_57, %c512] : memref<16x1024xf32, #tpu.memory_space<vmem>>, vector<2x128xf32>
    tpu.vector_store %arg8[%c0_57, %c512], %72 {strides = array<i32>} : memref<16x1024xf32, #tpu.memory_space<vmem>>, vector<2x128xf32>,
    %74 = vector.extract_strided_slice %71 {offsets = [0, 128], sizes = [2, 128], strides = [1, 1]} : vector<2x1024xf32> to vector<2x128xf32>
    %c2_58 = arith.constant 2 : index
    %c512_59 = arith.constant 512 : index
    %75 = vector.load %arg8[%c2_58, %c512_59] : memref<16x1024xf32, #tpu.memory_space<vmem>>, vector<2x128xf32>
    tpu.vector_store %arg8[%c2_58, %c512_59], %74 {strides = array<i32>} : memref<16x1024xf32, #tpu.memory_space<vmem>>, vector<2x128xf32>,
    %76 = vector.extract_strided_slice %71 {offsets = [0, 256], sizes = [2, 128], strides = [1, 1]} : vector<2x1024xf32> to vector<2x128xf32>
    %c4_60 = arith.constant 4 : index
    %c512_61 = arith.constant 512 : index
    %77 = vector.load %arg8[%c4_60, %c512_61] : memref<16x1024xf32, #tpu.memory_space<vmem>>, vector<2x128xf32>
    tpu.vector_store %arg8[%c4_60, %c512_61], %76 {strides = array<i32>} : memref<16x1024xf32, #tpu.memory_space<vmem>>, vector<2x128xf32>,
    %78 = vector.extract_strided_slice %71 {offsets = [0, 384], sizes = [2, 128], strides = [1, 1]} : vector<2x1024xf32> to vector<2x128xf32>
    %c6_62 = arith.constant 6 : index
    %c512_63 = arith.constant 512 : index
    %79 = vector.load %arg8[%c6_62, %c512_63] : memref<16x1024xf32, #tpu.memory_space<vmem>>, vector<2x128xf32>
    tpu.vector_store %arg8[%c6_62, %c512_63], %78 {strides = array<i32>} : memref<16x1024xf32, #tpu.memory_space<vmem>>, vector<2x128xf32>,
    %80 = vector.extract_strided_slice %71 {offsets = [0, 512], sizes = [2, 128], strides = [1, 1]} : vector<2x1024xf32> to vector<2x128xf32>
    %c8_64 = arith.constant 8 : index
    %c512_65 = arith.constant 512 : index
    %81 = vector.load %arg8[%c8_64, %c512_65] : memref<16x1024xf32, #tpu.memory_space<vmem>>, vector<2x128xf32>
    tpu.vector_store %arg8[%c8_64, %c512_65], %80 {strides = array<i32>} : memref<16x1024xf32, #tpu.memory_space<vmem>>, vector<2x128xf32>,
    %82 = vector.extract_strided_slice %71 {offsets = [0, 640], sizes = [2, 128], strides = [1, 1]} : vector<2x1024xf32> to vector<2x128xf32>
    %c10_66 = arith.constant 10 : index
    %c512_67 = arith.constant 512 : index
    %83 = vector.load %arg8[%c10_66, %c512_67] : memref<16x1024xf32, #tpu.memory_space<vmem>>, vector<2x128xf32>
    tpu.vector_store %arg8[%c10_66, %c512_67], %82 {strides = array<i32>} : memref<16x1024xf32, #tpu.memory_space<vmem>>, vector<2x128xf32>,
    %84 = vector.extract_strided_slice %71 {offsets = [0, 768], sizes = [2, 128], strides = [1, 1]} : vector<2x1024xf32> to vector<2x128xf32>
    %c12_68 = arith.constant 12 : index
    %c512_69 = arith.constant 512 : index
    %85 = vector.load %arg8[%c12_68, %c512_69] : memref<16x1024xf32, #tpu.memory_space<vmem>>, vector<2x128xf32>
    tpu.vector_store %arg8[%c12_68, %c512_69], %84 {strides = array<i32>} : memref<16x1024xf32, #tpu.memory_space<vmem>>, vector<2x128xf32>,
    %86 = vector.extract_strided_slice %71 {offsets = [0, 896], sizes = [2, 128], strides = [1, 1]} : vector<2x1024xf32> to vector<2x128xf32>
    %c14_70 = arith.constant 14 : index
    %c512_71 = arith.constant 512 : index
    %87 = vector.load %arg8[%c14_70, %c512_71] : memref<16x1024xf32, #tpu.memory_space<vmem>>, vector<2x128xf32>
    tpu.vector_store %arg8[%c14_70, %c512_71], %86 {strides = array<i32>} : memref<16x1024xf32, #tpu.memory_space<vmem>>, vector<2x128xf32>,
    %88 = vector.extract_strided_slice %2 {offsets = [10, 0], sizes = [2, 1024], strides = [1, 1]} : vector<16x1024xf32> to vector<2x1024xf32>
    %89 = vector.extract_strided_slice %88 {offsets = [0, 0], sizes = [2, 128], strides = [1, 1]} : vector<2x1024xf32> to vector<2x128xf32>
    %c0_72 = arith.constant 0 : index
    %c640 = arith.constant 640 : index
    %90 = vector.load %arg8[%c0_72, %c640] : memref<16x1024xf32, #tpu.memory_space<vmem>>, vector<2x128xf32>
    tpu.vector_store %arg8[%c0_72, %c640], %89 {strides = array<i32>} : memref<16x1024xf32, #tpu.memory_space<vmem>>, vector<2x128xf32>,
    %91 = vector.extract_strided_slice %88 {offsets = [0, 128], sizes = [2, 128], strides = [1, 1]} : vector<2x1024xf32> to vector<2x128xf32>
    %c2_73 = arith.constant 2 : index
    %c640_74 = arith.constant 640 : index
    %92 = vector.load %arg8[%c2_73, %c640_74] : memref<16x1024xf32, #tpu.memory_space<vmem>>, vector<2x128xf32>
    tpu.vector_store %arg8[%c2_73, %c640_74], %91 {strides = array<i32>} : memref<16x1024xf32, #tpu.memory_space<vmem>>, vector<2x128xf32>,
    %93 = vector.extract_strided_slice %88 {offsets = [0, 256], sizes = [2, 128], strides = [1, 1]} : vector<2x1024xf32> to vector<2x128xf32>
    %c4_75 = arith.constant 4 : index
    %c640_76 = arith.constant 640 : index
    %94 = vector.load %arg8[%c4_75, %c640_76] : memref<16x1024xf32, #tpu.memory_space<vmem>>, vector<2x128xf32>
    tpu.vector_store %arg8[%c4_75, %c640_76], %93 {strides = array<i32>} : memref<16x1024xf32, #tpu.memory_space<vmem>>, vector<2x128xf32>,
    %95 = vector.extract_strided_slice %88 {offsets = [0, 384], sizes = [2, 128], strides = [1, 1]} : vector<2x1024xf32> to vector<2x128xf32>
    %c6_77 = arith.constant 6 : index
    %c640_78 = arith.constant 640 : index
    %96 = vector.load %arg8[%c6_77, %c640_78] : memref<16x1024xf32, #tpu.memory_space<vmem>>, vector<2x128xf32>
    tpu.vector_store %arg8[%c6_77, %c640_78], %95 {strides = array<i32>} : memref<16x1024xf32, #tpu.memory_space<vmem>>, vector<2x128xf32>,
    %97 = vector.extract_strided_slice %88 {offsets = [0, 512], sizes = [2, 128], strides = [1, 1]} : vector<2x1024xf32> to vector<2x128xf32>
    %c8_79 = arith.constant 8 : index
    %c640_80 = arith.constant 640 : index
    %98 = vector.load %arg8[%c8_79, %c640_80] : memref<16x1024xf32, #tpu.memory_space<vmem>>, vector<2x128xf32>
    tpu.vector_store %arg8[%c8_79, %c640_80], %97 {strides = array<i32>} : memref<16x1024xf32, #tpu.memory_space<vmem>>, vector<2x128xf32>,
    %99 = vector.extract_strided_slice %88 {offsets = [0, 640], sizes = [2, 128], strides = [1, 1]} : vector<2x1024xf32> to vector<2x128xf32>
    %c10_81 = arith.constant 10 : index
    %c640_82 = arith.constant 640 : index
    %100 = vector.load %arg8[%c10_81, %c640_82] : memref<16x1024xf32, #tpu.memory_space<vmem>>, vector<2x128xf32>
    tpu.vector_store %arg8[%c10_81, %c640_82], %99 {strides = array<i32>} : memref<16x1024xf32, #tpu.memory_space<vmem>>, vector<2x128xf32>,
    %101 = vector.extract_strided_slice %88 {offsets = [0, 768], sizes = [2, 128], strides = [1, 1]} : vector<2x1024xf32> to vector<2x128xf32>
    %c12_83 = arith.constant 12 : index
    %c640_84 = arith.constant 640 : index
    %102 = vector.load %arg8[%c12_83, %c640_84] : memref<16x1024xf32, #tpu.memory_space<vmem>>, vector<2x128xf32>
    tpu.vector_store %arg8[%c12_83, %c640_84], %101 {strides = array<i32>} : memref<16x1024xf32, #tpu.memory_space<vmem>>, vector<2x128xf32>,
    %103 = vector.extract_strided_slice %88 {offsets = [0, 896], sizes = [2, 128], strides = [1, 1]} : vector<2x1024xf32> to vector<2x128xf32>
    %c14_85 = arith.constant 14 : index
    %c640_86 = arith.constant 640 : index
    %104 = vector.load %arg8[%c14_85, %c640_86] : memref<16x1024xf32, #tpu.memory_space<vmem>>, vector<2x128xf32>
    tpu.vector_store %arg8[%c14_85, %c640_86], %103 {strides = array<i32>} : memref<16x1024xf32, #tpu.memory_space<vmem>>, vector<2x128xf32>,
    %105 = vector.extract_strided_slice %2 {offsets = [12, 0], sizes = [2, 1024], strides = [1, 1]} : vector<16x1024xf32> to vector<2x1024xf32>
    %106 = vector.extract_strided_slice %105 {offsets = [0, 0], sizes = [2, 128], strides = [1, 1]} : vector<2x1024xf32> to vector<2x128xf32>
    %c0_87 = arith.constant 0 : index
    %c768 = arith.constant 768 : index
    %107 = vector.load %arg8[%c0_87, %c768] : memref<16x1024xf32, #tpu.memory_space<vmem>>, vector<2x128xf32>
    tpu.vector_store %arg8[%c0_87, %c768], %106 {strides = array<i32>} : memref<16x1024xf32, #tpu.memory_space<vmem>>, vector<2x128xf32>,
    %108 = vector.extract_strided_slice %105 {offsets = [0, 128], sizes = [2, 128], strides = [1, 1]} : vector<2x1024xf32> to vector<2x128xf32>
    %c2_88 = arith.constant 2 : index
    %c768_89 = arith.constant 768 : index
    %109 = vector.load %arg8[%c2_88, %c768_89] : memref<16x1024xf32, #tpu.memory_space<vmem>>, vector<2x128xf32>
    tpu.vector_store %arg8[%c2_88, %c768_89], %108 {strides = array<i32>} : memref<16x1024xf32, #tpu.memory_space<vmem>>, vector<2x128xf32>,
    %110 = vector.extract_strided_slice %105 {offsets = [0, 256], sizes = [2, 128], strides = [1, 1]} : vector<2x1024xf32> to vector<2x128xf32>
    %c4_90 = arith.constant 4 : index
    %c768_91 = arith.constant 768 : index
    %111 = vector.load %arg8[%c4_90, %c768_91] : memref<16x1024xf32, #tpu.memory_space<vmem>>, vector<2x128xf32>
    tpu.vector_store %arg8[%c4_90, %c768_91], %110 {strides = array<i32>} : memref<16x1024xf32, #tpu.memory_space<vmem>>, vector<2x128xf32>,
    %112 = vector.extract_strided_slice %105 {offsets = [0, 384], sizes = [2, 128], strides = [1, 1]} : vector<2x1024xf32> to vector<2x128xf32>
    %c6_92 = arith.constant 6 : index
    %c768_93 = arith.constant 768 : index
    %113 = vector.load %arg8[%c6_92, %c768_93] : memref<16x1024xf32, #tpu.memory_space<vmem>>, vector<2x128xf32>
    tpu.vector_store %arg8[%c6_92, %c768_93], %112 {strides = array<i32>} : memref<16x1024xf32, #tpu.memory_space<vmem>>, vector<2x128xf32>,
    %114 = vector.extract_strided_slice %105 {offsets = [0, 512], sizes = [2, 128], strides = [1, 1]} : vector<2x1024xf32> to vector<2x128xf32>
    %c8_94 = arith.constant 8 : index
    %c768_95 = arith.constant 768 : index
    %115 = vector.load %arg8[%c8_94, %c768_95] : memref<16x1024xf32, #tpu.memory_space<vmem>>, vector<2x128xf32>
    tpu.vector_store %arg8[%c8_94, %c768_95], %114 {strides = array<i32>} : memref<16x1024xf32, #tpu.memory_space<vmem>>, vector<2x128xf32>,
    %116 = vector.extract_strided_slice %105 {offsets = [0, 640], sizes = [2, 128], strides = [1, 1]} : vector<2x1024xf32> to vector<2x128xf32>
    %c10_96 = arith.constant 10 : index
    %c768_97 = arith.constant 768 : index
    %117 = vector.load %arg8[%c10_96, %c768_97] : memref<16x1024xf32, #tpu.memory_space<vmem>>, vector<2x128xf32>
    tpu.vector_store %arg8[%c10_96, %c768_97], %116 {strides = array<i32>} : memref<16x1024xf32, #tpu.memory_space<vmem>>, vector<2x128xf32>,
    %118 = vector.extract_strided_slice %105 {offsets = [0, 768], sizes = [2, 128], strides = [1, 1]} : vector<2x1024xf32> to vector<2x128xf32>
    %c12_98 = arith.constant 12 : index
    %c768_99 = arith.constant 768 : index
    %119 = vector.load %arg8[%c12_98, %c768_99] : memref<16x1024xf32, #tpu.memory_space<vmem>>, vector<2x128xf32>
    tpu.vector_store %arg8[%c12_98, %c768_99], %118 {strides = array<i32>} : memref<16x1024xf32, #tpu.memory_space<vmem>>, vector<2x128xf32>,
    %120 = vector.extract_strided_slice %105 {offsets = [0, 896], sizes = [2, 128], strides = [1, 1]} : vector<2x1024xf32> to vector<2x128xf32>
    %c14_100 = arith.constant 14 : index
    %c768_101 = arith.constant 768 : index
    %121 = vector.load %arg8[%c14_100, %c768_101] : memref<16x1024xf32, #tpu.memory_space<vmem>>, vector<2x128xf32>
    tpu.vector_store %arg8[%c14_100, %c768_101], %120 {strides = array<i32>} : memref<16x1024xf32, #tpu.memory_space<vmem>>, vector<2x128xf32>,
    %122 = vector.extract_strided_slice %2 {offsets = [14, 0], sizes = [2, 1024], strides = [1, 1]} : vector<16x1024xf32> to vector<2x1024xf32>
    %123 = vector.extract_strided_slice %122 {offsets = [0, 0], sizes = [2, 128], strides = [1, 1]} : vector<2x1024xf32> to vector<2x128xf32>
    %c0_102 = arith.constant 0 : index
    %c896 = arith.constant 896 : index
    %124 = vector.load %arg8[%c0_102, %c896] : memref<16x1024xf32, #tpu.memory_space<vmem>>, vector<2x128xf32>
    tpu.vector_store %arg8[%c0_102, %c896], %123 {strides = array<i32>} : memref<16x1024xf32, #tpu.memory_space<vmem>>, vector<2x128xf32>,
    %125 = vector.extract_strided_slice %122 {offsets = [0, 128], sizes = [2, 128], strides = [1, 1]} : vector<2x1024xf32> to vector<2x128xf32>
    %c2_103 = arith.constant 2 : index
    %c896_104 = arith.constant 896 : index
    %126 = vector.load %arg8[%c2_103, %c896_104] : memref<16x1024xf32, #tpu.memory_space<vmem>>, vector<2x128xf32>
    tpu.vector_store %arg8[%c2_103, %c896_104], %125 {strides = array<i32>} : memref<16x1024xf32, #tpu.memory_space<vmem>>, vector<2x128xf32>,
    %127 = vector.extract_strided_slice %122 {offsets = [0, 256], sizes = [2, 128], strides = [1, 1]} : vector<2x1024xf32> to vector<2x128xf32>
    %c4_105 = arith.constant 4 : index
    %c896_106 = arith.constant 896 : index
    %128 = vector.load %arg8[%c4_105, %c896_106] : memref<16x1024xf32, #tpu.memory_space<vmem>>, vector<2x128xf32>
    tpu.vector_store %arg8[%c4_105, %c896_106], %127 {strides = array<i32>} : memref<16x1024xf32, #tpu.memory_space<vmem>>, vector<2x128xf32>,
    %129 = vector.extract_strided_slice %122 {offsets = [0, 384], sizes = [2, 128], strides = [1, 1]} : vector<2x1024xf32> to vector<2x128xf32>
    %c6_107 = arith.constant 6 : index
    %c896_108 = arith.constant 896 : index
    %130 = vector.load %arg8[%c6_107, %c896_108] : memref<16x1024xf32, #tpu.memory_space<vmem>>, vector<2x128xf32>
    tpu.vector_store %arg8[%c6_107, %c896_108], %129 {strides = array<i32>} : memref<16x1024xf32, #tpu.memory_space<vmem>>, vector<2x128xf32>,
    %131 = vector.extract_strided_slice %122 {offsets = [0, 512], sizes = [2, 128], strides = [1, 1]} : vector<2x1024xf32> to vector<2x128xf32>
    %c8_109 = arith.constant 8 : index
    %c896_110 = arith.constant 896 : index
    %132 = vector.load %arg8[%c8_109, %c896_110] : memref<16x1024xf32, #tpu.memory_space<vmem>>, vector<2x128xf32>
    tpu.vector_store %arg8[%c8_109, %c896_110], %131 {strides = array<i32>} : memref<16x1024xf32, #tpu.memory_space<vmem>>, vector<2x128xf32>,
    %133 = vector.extract_strided_slice %122 {offsets = [0, 640], sizes = [2, 128], strides = [1, 1]} : vector<2x1024xf32> to vector<2x128xf32>
    %c10_111 = arith.constant 10 : index
    %c896_112 = arith.constant 896 : index
    %134 = vector.load %arg8[%c10_111, %c896_112] : memref<16x1024xf32, #tpu.memory_space<vmem>>, vector<2x128xf32>
    tpu.vector_store %arg8[%c10_111, %c896_112], %133 {strides = array<i32>} : memref<16x1024xf32, #tpu.memory_space<vmem>>, vector<2x128xf32>,
    %135 = vector.extract_strided_slice %122 {offsets = [0, 768], sizes = [2, 128], strides = [1, 1]} : vector<2x1024xf32> to vector<2x128xf32>
    %c12_113 = arith.constant 12 : index
    %c896_114 = arith.constant 896 : index
    %136 = vector.load %arg8[%c12_113, %c896_114] : memref<16x1024xf32, #tpu.memory_space<vmem>>, vector<2x128xf32>
    tpu.vector_store %arg8[%c12_113, %c896_114], %135 {strides = array<i32>} : memref<16x1024xf32, #tpu.memory_space<vmem>>, vector<2x128xf32>,
    %137 = vector.extract_strided_slice %122 {offsets = [0, 896], sizes = [2, 128], strides = [1, 1]} : vector<2x1024xf32> to vector<2x128xf32>
    %c14_115 = arith.constant 14 : index
    %c896_116 = arith.constant 896 : index
    %138 = vector.load %arg8[%c14_115, %c896_116] : memref<16x1024xf32, #tpu.memory_space<vmem>>, vector<2x128xf32>
    tpu.vector_store %arg8[%c14_115, %c896_116], %137 {strides = array<i32>} : memref<16x1024xf32, #tpu.memory_space<vmem>>, vector<2x128xf32>,
    %c0_117 = arith.constant 0 : index
    %c0_118 = arith.constant 0 : index
    %139 = vector.load %arg8[%c0_117, %c0_118] : memref<16x1024xf32, #tpu.memory_space<vmem>>, vector<16x1024xf32>
    %140 = arith.truncf %139 : vector<16x1024xf32> to vector<16x1024xbf16>
    %c0_119 = arith.constant 0 : index
    %c0_120 = arith.constant 0 : index
    %141 = vector.load %arg6[%c0_119, %c0_120] : memref<1024x256xbf16, #tpu.memory_space<vmem>>, vector<1024x256xbf16>
    %cst_121 = arith.constant dense<0.000000e+00> : vector<16x256xf32>
    %142 = tpu.matmul %140, %141, %cst_121 {dimension_numbers = #tpu.dot_dimension_numbers<[1], [0], [0], [1], [0, 0, 1, 1], [], []>} : vector<16x1024xbf16>, vector<1024x256xbf16>, vector<16x256xf32> -> vector<16x256xf32>
    %143 = vector.extract_strided_slice %142 {offsets = [0, 0], sizes = [2, 256], strides = [1, 1]} : vector<16x256xf32> to vector<2x256xf32>
    %c0_122 = arith.constant 0 : index
    %144 = memref.load %arg1[%c0_122] : memref<8xf32, #tpu.memory_space<smem>>
    %145 = vector.broadcast %144 : f32 to vector<2x256xf32>
    %146 = arith.addf %143, %145 : vector<2x256xf32>
    %cst_123 = arith.constant 0.000000e+00 : f32
    %147 = vector.broadcast %cst_123 : f32 to vector<2x256xf32>
    %148 = arith.maximumf %146, %147 : vector<2x256xf32>
    %c0_124 = arith.constant 0 : index
    %149 = memref.load %arg2[%c0_124] : memref<8xf32, #tpu.memory_space<smem>>
    %150 = vector.broadcast %149 : f32 to vector<2x256xf32>
    %151 = arith.mulf %148, %150 : vector<2x256xf32>
    %c1 = arith.constant 1 : index
    %152 = memref.load %arg2[%c1] : memref<8xf32, #tpu.memory_space<smem>>
    %c1_125 = arith.constant 1 : index
    %153 = memref.load %arg1[%c1_125] : memref<8xf32, #tpu.memory_space<smem>>
    %154 = vector.extract_strided_slice %142 {offsets = [2, 0], sizes = [2, 256], strides = [1, 1]} : vector<16x256xf32> to vector<2x256xf32>
    %155 = vector.broadcast %153 : f32 to vector<2x256xf32>
    %156 = arith.addf %154, %155 : vector<2x256xf32>
    %cst_126 = arith.constant 0.000000e+00 : f32
    %157 = vector.broadcast %cst_126 : f32 to vector<2x256xf32>
    %158 = arith.maximumf %156, %157 : vector<2x256xf32>
    %159 = vector.broadcast %152 : f32 to vector<2x256xf32>
    %160 = arith.mulf %158, %159 : vector<2x256xf32>
    %161 = arith.addf %151, %160 : vector<2x256xf32>
    %c2_127 = arith.constant 2 : index
    %162 = memref.load %arg2[%c2_127] : memref<8xf32, #tpu.memory_space<smem>>
    %c2_128 = arith.constant 2 : index
    %163 = memref.load %arg1[%c2_128] : memref<8xf32, #tpu.memory_space<smem>>
    %164 = vector.extract_strided_slice %142 {offsets = [4, 0], sizes = [2, 256], strides = [1, 1]} : vector<16x256xf32> to vector<2x256xf32>
    %165 = vector.broadcast %163 : f32 to vector<2x256xf32>
    %166 = arith.addf %164, %165 : vector<2x256xf32>
    %cst_129 = arith.constant 0.000000e+00 : f32
    %167 = vector.broadcast %cst_129 : f32 to vector<2x256xf32>
    %168 = arith.maximumf %166, %167 : vector<2x256xf32>
    %169 = vector.broadcast %162 : f32 to vector<2x256xf32>
    %170 = arith.mulf %168, %169 : vector<2x256xf32>
    %171 = arith.addf %161, %170 : vector<2x256xf32>
    %c3 = arith.constant 3 : index
    %172 = memref.load %arg2[%c3] : memref<8xf32, #tpu.memory_space<smem>>
    %c3_130 = arith.constant 3 : index
    %173 = memref.load %arg1[%c3_130] : memref<8xf32, #tpu.memory_space<smem>>
    %174 = vector.extract_strided_slice %142 {offsets = [6, 0], sizes = [2, 256], strides = [1, 1]} : vector<16x256xf32> to vector<2x256xf32>
    %175 = vector.broadcast %173 : f32 to vector<2x256xf32>
    %176 = arith.addf %174, %175 : vector<2x256xf32>
    %cst_131 = arith.constant 0.000000e+00 : f32
    %177 = vector.broadcast %cst_131 : f32 to vector<2x256xf32>
    %178 = arith.maximumf %176, %177 : vector<2x256xf32>
    %179 = vector.broadcast %172 : f32 to vector<2x256xf32>
    %180 = arith.mulf %178, %179 : vector<2x256xf32>
    %181 = arith.addf %171, %180 : vector<2x256xf32>
    %c4_132 = arith.constant 4 : index
    %182 = memref.load %arg2[%c4_132] : memref<8xf32, #tpu.memory_space<smem>>
    %c4_133 = arith.constant 4 : index
    %183 = memref.load %arg1[%c4_133] : memref<8xf32, #tpu.memory_space<smem>>
    %184 = vector.extract_strided_slice %142 {offsets = [8, 0], sizes = [2, 256], strides = [1, 1]} : vector<16x256xf32> to vector<2x256xf32>
    %185 = vector.broadcast %183 : f32 to vector<2x256xf32>
    %186 = arith.addf %184, %185 : vector<2x256xf32>
    %cst_134 = arith.constant 0.000000e+00 : f32
    %187 = vector.broadcast %cst_134 : f32 to vector<2x256xf32>
    %188 = arith.maximumf %186, %187 : vector<2x256xf32>
    %189 = vector.broadcast %182 : f32 to vector<2x256xf32>
    %190 = arith.mulf %188, %189 : vector<2x256xf32>
    %191 = arith.addf %181, %190 : vector<2x256xf32>
    %c5 = arith.constant 5 : index
    %192 = memref.load %arg2[%c5] : memref<8xf32, #tpu.memory_space<smem>>
    %c5_135 = arith.constant 5 : index
    %193 = memref.load %arg1[%c5_135] : memref<8xf32, #tpu.memory_space<smem>>
    %194 = vector.extract_strided_slice %142 {offsets = [10, 0], sizes = [2, 256], strides = [1, 1]} : vector<16x256xf32> to vector<2x256xf32>
    %195 = vector.broadcast %193 : f32 to vector<2x256xf32>
    %196 = arith.addf %194, %195 : vector<2x256xf32>
    %cst_136 = arith.constant 0.000000e+00 : f32
    %197 = vector.broadcast %cst_136 : f32 to vector<2x256xf32>
    %198 = arith.maximumf %196, %197 : vector<2x256xf32>
    %199 = vector.broadcast %192 : f32 to vector<2x256xf32>
    %200 = arith.mulf %198, %199 : vector<2x256xf32>
    %201 = arith.addf %191, %200 : vector<2x256xf32>
    %c6_137 = arith.constant 6 : index
    %202 = memref.load %arg2[%c6_137] : memref<8xf32, #tpu.memory_space<smem>>
    %c6_138 = arith.constant 6 : index
    %203 = memref.load %arg1[%c6_138] : memref<8xf32, #tpu.memory_space<smem>>
    %204 = vector.extract_strided_slice %142 {offsets = [12, 0], sizes = [2, 256], strides = [1, 1]} : vector<16x256xf32> to vector<2x256xf32>
    %205 = vector.broadcast %203 : f32 to vector<2x256xf32>
    %206 = arith.addf %204, %205 : vector<2x256xf32>
    %cst_139 = arith.constant 0.000000e+00 : f32
    %207 = vector.broadcast %cst_139 : f32 to vector<2x256xf32>
    %208 = arith.maximumf %206, %207 : vector<2x256xf32>
    %209 = vector.broadcast %202 : f32 to vector<2x256xf32>
    %210 = arith.mulf %208, %209 : vector<2x256xf32>
    %211 = arith.addf %201, %210 : vector<2x256xf32>
    %c7 = arith.constant 7 : index
    %212 = memref.load %arg2[%c7] : memref<8xf32, #tpu.memory_space<smem>>
    %c7_140 = arith.constant 7 : index
    %213 = memref.load %arg1[%c7_140] : memref<8xf32, #tpu.memory_space<smem>>
    %214 = vector.extract_strided_slice %142 {offsets = [14, 0], sizes = [2, 256], strides = [1, 1]} : vector<16x256xf32> to vector<2x256xf32>
    %215 = vector.broadcast %213 : f32 to vector<2x256xf32>
    %216 = arith.addf %214, %215 : vector<2x256xf32>
    %cst_141 = arith.constant 0.000000e+00 : f32
    %217 = vector.broadcast %cst_141 : f32 to vector<2x256xf32>
    %218 = arith.maximumf %216, %217 : vector<2x256xf32>
    %219 = vector.broadcast %212 : f32 to vector<2x256xf32>
    %220 = arith.mulf %218, %219 : vector<2x256xf32>
    %221 = arith.addf %211, %220 : vector<2x256xf32>
    %c0_142 = arith.constant 0 : index
    %222 = memref.load %arg3[%c0_142] : memref<1xf32, #tpu.memory_space<smem>>
    %223 = vector.broadcast %222 : f32 to vector<2x256xf32>
    %224 = arith.addf %221, %223 : vector<2x256xf32>
    %cst_143 = arith.constant 0.000000e+00 : f32
    %225 = vector.broadcast %cst_143 : f32 to vector<2x256xf32>
    %226 = arith.maximumf %224, %225 : vector<2x256xf32>
    %c0_144 = arith.constant 0 : index
    %c0_145 = arith.constant 0 : index
    %227 = vector.load %arg7[%c0_144, %c0_145] : memref<2x256xf32, #tpu.memory_space<vmem>>, vector<2x256xf32>
    tpu.vector_store %arg7[%c0_144, %c0_145], %226 {strides = array<i32>} : memref<2x256xf32, #tpu.memory_space<vmem>>, vector<2x256xf32>,
    return
  }
  func.func @transform_0(%arg0: i32) -> i32 {
    %c0_i32 = arith.constant 0 : i32
    %c0_i32_0 = arith.constant 0 : i32
    return %c0_i32 : i32
  }
  func.func @transform_1(%arg0: i32) -> i32 {
    %c0_i32 = arith.constant 0 : i32
    %c0_i32_0 = arith.constant 0 : i32
    return %c0_i32 : i32
  }
  func.func @transform_2(%arg0: i32) -> i32 {
    %c0_i32 = arith.constant 0 : i32
    %c0_i32_0 = arith.constant 0 : i32
    return %c0_i32 : i32
  }
  func.func @transform_3(%arg0: i32) -> (i32, i32) {
    %c0_i32 = arith.constant 0 : i32
    %c0_i32_0 = arith.constant 0 : i32
    %c0_i32_1 = arith.constant 0 : i32
    return %c0_i32, %c0_i32_0 : i32, i32
  }
  func.func @transform_4(%arg0: i32) -> (i32, i32) {
    %c0_i32 = arith.constant 0 : i32
    %c0_i32_0 = arith.constant 0 : i32
    %c0_i32_1 = arith.constant 0 : i32
    return %c0_i32, %c0_i32_0 : i32, i32
  }
  func.func @transform_5(%arg0: i32) -> (i32, i32) {
    %c0_i32 = arith.constant 0 : i32
    %c0_i32_0 = arith.constant 0 : i32
    %c0_i32_1 = arith.constant 0 : i32
    return %c0_i32, %c0_i32_0 : i32, i32
  }
  func.func @transform_6(%arg0: i32) -> (i32, i32) {
    %c0_i32 = arith.constant 0 : i32
    %c0_i32_0 = arith.constant 0 : i32
    %c0_i32_1 = arith.constant 0 : i32
    return %c0_i32, %c0_i32_0 : i32, i32
  }
}

</mosaic_0001>

<llo_original>
// kernel: tpu_custom_call.1
$region0: #{tpu_custom_call.1}
  #allocation0 [shape = 'u32[]', space=smem, size = 0x4, offset = 0x4, fixed_abs, tag = 'smem constant byte address 0x4 - core index']
  #allocation1 [shape = 'u32[144,128]{1,0:T(1,128)}', space=vmem, size = 0x12000, scoped, tag = 'internal scratch']
  #allocation2 [shape = 'f32[16,1024]{1,0:T(8,128)}', space=vmem, size = 0x10000, scoped, tag = 'scratch operand']
  #allocation3 [shape = 'f32[1]{0:T(128)S(6)}', space=smem, size = 0x200, scoped, tag = 'scoped memory for tpu_custom_call.1']
  %s0 = inlined_call_operand.vmem [shape: f32[8], index: 0, kind: input, shape index: {}]
  %s1 = inlined_call_operand.vmem [shape: f32[8], index: 1, kind: input, shape index: {}]
  %s2 = inlined_call_operand.<no memory space> [shape: f32[1], index: 2, kind: input, shape index: {}]
  %s3 = inlined_call_operand.vmem [shape: bf16[16,128], index: 3, kind: input, shape index: {}]
  %s4 = inlined_call_operand.hbm [shape: bf16[128,1024], index: 4, kind: input, shape index: {}]
  %s5 = inlined_call_operand.hbm [shape: bf16[1024,256], index: 5, kind: input, shape index: {}]
  %s6 = inlined_call_operand.hbm [shape: f32[2,256], index: 6, kind: output, shape index: {}]
  %s7 = sld [smem:[#allocation0]]
  $region50: #{tpu_custom_call.1} parent=0
    _
  %s9 = ssub.s32 1, %s7
  %s10 = scalar_select 0, %s9, %s7
  %11 = sst [smem:[#allocation3]] %s2
  $region1: #{tpu_custom_call.1} parent=0
    #allocation4 [shape = 'u8[512]{0}', space=smem, size = 0x200, scoped, tag = 'input window, operand 0, single buffered']
    #allocation5 [shape = 's32[1]{0}', space=sflag, size = 0x4, scoped, tag = 'scoped memory for tpu_custom_call.1']
    #allocation6 [shape = 's32[1]{0}', space=sflag, size = 0x4, scoped, tag = 'scoped memory for tpu_custom_call.1']
    #allocation7 [shape = 's32[1]{0}', space=sflag, size = 0x4, scoped, tag = 'scoped memory for tpu_custom_call.1']
    #allocation8 [shape = 'u8[512]{0}', space=smem, size = 0x200, scoped, tag = 'input window, operand 1, single buffered']
    #allocation9 [shape = 's32[1]{0}', space=sflag, size = 0x4, scoped, tag = 'scoped memory for tpu_custom_call.1']
    #allocation10 [shape = 'u8[262144]{0}', space=vmem, size = 0x40000, scoped, tag = 'input window, operand 4, single buffered']
    #allocation11 [shape = 'u8[524288]{0}', space=vmem, size = 0x80000, scoped, tag = 'input window, operand 5, single buffered']
    #allocation12 [shape = 's32[1]{0}', space=sflag, size = 0x4, scoped, tag = 'scoped memory for tpu_custom_call.1']
    #allocation13 [shape = 'u8[2048]{0}', space=vmem, size = 0x800, scoped, tag = 'output window, operand 0, single buffered']
    %12 = vsyncpa [#allocation7], 0
    %13 = vsyncpa [#allocation9], 0
    %14 = vsyncpa [#allocation5], 0
    %15 = vsyncpa [#allocation12], 0
    %16 = vsyncpa [#allocation6], 0
    // Predicated region
    $region2: #{tpu_custom_call.1} parent=1 // pred_check
      _
    $region3: #{tpu_custom_call.1} parent=1 // pred_check_branch
      %18 = sbr.rel (0) target = $region5
    $region4: #{tpu_custom_call.1} parent=1 // pred_region
      %s20 = ssub.s32 16, 16
      %21 = vsyncadd [#allocation7], %s20
      %s23 = sshll.u32 %s0, 4
      %s24 = int_to_ptr.vmem [resolvable:$true] %s23
      %26 = dma.vmem_to_smem %s24, 16, [#allocation4], [#allocation7]
    $region5: #{tpu_custom_call.1} parent=1 // pred_fallthru
      _
    // Predicated region
    $region6: #{tpu_custom_call.1} parent=1 // pred_check
      _
    $region7: #{tpu_custom_call.1} parent=1 // pred_check_branch
      %28 = sbr.rel (0) target = $region9
    $region8: #{tpu_custom_call.1} parent=1 // pred_region
      %s30 = ssub.s32 16, 16
      %31 = vsyncadd [#allocation9], %s30
      %s33 = sshll.u32 %s1, 4
      %s34 = int_to_ptr.vmem [resolvable:$true] %s33
      %36 = dma.vmem_to_smem %s34, 16, [#allocation8], [#allocation9]
    $region9: #{tpu_custom_call.1} parent=1 // pred_fallthru
      _
    // Predicated region
    $region10: #{tpu_custom_call.1} parent=1 // pred_check
      _
    $region11: #{tpu_custom_call.1} parent=1 // pred_check_branch
      %38 = sbr.rel (0) target = $region13
    $region12: #{tpu_custom_call.1} parent=1 // pred_region
      _
    $region13: #{tpu_custom_call.1} parent=1 // pred_fallthru
      _
    // Predicated region
    $region14: #{tpu_custom_call.1} parent=1 // pred_check
      _
    $region15: #{tpu_custom_call.1} parent=1 // pred_check_branch
      %40 = sbr.rel (0) target = $region17
    $region16: #{tpu_custom_call.1} parent=1 // pred_region
      _
    $region17: #{tpu_custom_call.1} parent=1 // pred_fallthru
      _
    // Predicated region
    $region18: #{tpu_custom_call.1} parent=1 // pred_check
      _
    $region19: #{tpu_custom_call.1} parent=1 // pred_check_branch
      %42 = sbr.rel (0) target = $region21
    $region20: #{tpu_custom_call.1} parent=1 // pred_region
      %s44 = ssub.s32 8192, 8192
      %45 = vsyncadd [#allocation5], %s44
      %s46 = sshll.u32 [#allocation10], 4
      %s47 = int_to_ptr.vmem [resolvable:$true] %s46
      %52 = dma.hbm_to_vmem [thread:$0]  %s4, 8192, %s47, [#allocation5], 512, 512, 32
    $region21: #{tpu_custom_call.1} parent=1 // pred_fallthru
      _
    // Predicated region
    $region22: #{tpu_custom_call.1} parent=1 // pred_check
      _
    $region23: #{tpu_custom_call.1} parent=1 // pred_check_branch
      %54 = sbr.rel (0) target = $region25
    $region24: #{tpu_custom_call.1} parent=1 // pred_region
      %s56 = ssub.s32 16384, 16384
      %57 = vsyncadd [#allocation12], %s56
      %s58 = sshll.u32 [#allocation11], 4
      %s59 = int_to_ptr.vmem [resolvable:$true] %s58
      %64 = dma.hbm_to_vmem [thread:$0]  %s5, 16384, %s59, [#allocation12], 128, 128, 8
    $region25: #{tpu_custom_call.1} parent=1 // pred_fallthru
      _
    // Predicated region
    $region26: #{tpu_custom_call.1} parent=1 // pred_check
      _
    $region27: #{tpu_custom_call.1} parent=1 // pred_check_branch
      %66 = sbr.rel (0) target = $region29
    $region28: #{tpu_custom_call.1} parent=1 // pred_region
      %67 = dma.done [#allocation7], 16
    $region29: #{tpu_custom_call.1} parent=1 // pred_fallthru
      _
    // Predicated region
    $region30: #{tpu_custom_call.1} parent=1 // pred_check
      _
    $region31: #{tpu_custom_call.1} parent=1 // pred_check_branch
      %69 = sbr.rel (0) target = $region33
    $region32: #{tpu_custom_call.1} parent=1 // pred_region
      %70 = dma.done [#allocation9], 16
    $region33: #{tpu_custom_call.1} parent=1 // pred_fallthru
      _
    // Predicated region
    $region34: #{tpu_custom_call.1} parent=1 // pred_check
      _
    $region35: #{tpu_custom_call.1} parent=1 // pred_check_branch
      %72 = sbr.rel (0) target = $region37
    $region36: #{tpu_custom_call.1} parent=1 // pred_region
      %73 = dma.done [#allocation5], 8192
    $region37: #{tpu_custom_call.1} parent=1 // pred_fallthru
      _
    // Predicated region
    $region38: #{tpu_custom_call.1} parent=1 // pred_check
      _
    $region39: #{tpu_custom_call.1} parent=1 // pred_check_branch
      %75 = sbr.rel (0) target = $region41
    $region40: #{tpu_custom_call.1} parent=1 // pred_region
      %76 = dma.done [#allocation12], 16384
    $region41: #{tpu_custom_call.1} parent=1 // pred_fallthru
      _
    %77 = sfence
    %v79 = vld [vmem:[%s3] sm:$0xf]
    %v80 = vld [vmem:[%s3 + $0x4] sm:$0xf]
    %v81 = vld [vmem:[#allocation10] sm:$0xff]
    %v82 = vld [vmem:[#allocation10 + $0x8] sm:$0xff]
    %v83 = vld [vmem:[#allocation10 + $0x10] sm:$0xff]
    %v84 = vld [vmem:[#allocation10 + $0x18] sm:$0xff]
    %v85 = vld [vmem:[#allocation10 + $0x20] sm:$0xff]
    %v86 = vld [vmem:[#allocation10 + $0x28] sm:$0xff]
    %v87 = vld [vmem:[#allocation10 + $0x30] sm:$0xff]
    %v88 = vld [vmem:[#allocation10 + $0x38] sm:$0xff]
    %v89 = vld [vmem:[#allocation10 + $0x40] sm:$0xff]
    %v90 = vld [vmem:[#allocation10 + $0x48] sm:$0xff]
    %v91 = vld [vmem:[#allocation10 + $0x50] sm:$0xff]
    %v92 = vld [vmem:[#allocation10 + $0x58] sm:$0xff]
    %v93 = vld [vmem:[#allocation10 + $0x60] sm:$0xff]
    %v94 = vld [vmem:[#allocation10 + $0x68] sm:$0xff]
    %v95 = vld [vmem:[#allocation10 + $0x70] sm:$0xff]
    %v96 = vld [vmem:[#allocation10 + $0x78] sm:$0xff]
    %v97 = vld [vmem:[#allocation10 + $0x80] sm:$0xff]
    %v98 = vld [vmem:[#allocation10 + $0x88] sm:$0xff]
    %v99 = vld [vmem:[#allocation10 + $0x90] sm:$0xff]
    %v100 = vld [vmem:[#allocation10 + $0x98] sm:$0xff]
    %v101 = vld [vmem:[#allocation10 + $0xa0] sm:$0xff]
    %v102 = vld [vmem:[#allocation10 + $0xa8] sm:$0xff]
    %v103 = vld [vmem:[#allocation10 + $0xb0] sm:$0xff]
    %v104 = vld [vmem:[#allocation10 + $0xb8] sm:$0xff]
    %v105 = vld [vmem:[#allocation10 + $0xc0] sm:$0xff]
    %v106 = vld [vmem:[#allocation10 + $0xc8] sm:$0xff]
    %v107 = vld [vmem:[#allocation10 + $0xd0] sm:$0xff]
    %v108 = vld [vmem:[#allocation10 + $0xd8] sm:$0xff]
    %v109 = vld [vmem:[#allocation10 + $0xe0] sm:$0xff]
    %v110 = vld [vmem:[#allocation10 + $0xe8] sm:$0xff]
    %v111 = vld [vmem:[#allocation10 + $0xf0] sm:$0xff]
    %v112 = vld [vmem:[#allocation10 + $0xf8] sm:$0xff]
    %v113 = vld [vmem:[#allocation10 + $0x100] sm:$0xff]
    %v114 = vld [vmem:[#allocation10 + $0x108] sm:$0xff]
    %v115 = vld [vmem:[#allocation10 + $0x110] sm:$0xff]
    %v116 = vld [vmem:[#allocation10 + $0x118] sm:$0xff]
    %v117 = vld [vmem:[#allocation10 + $0x120] sm:$0xff]
    %v118 = vld [vmem:[#allocation10 + $0x128] sm:$0xff]
    %v119 = vld [vmem:[#allocation10 + $0x130] sm:$0xff]
    %v120 = vld [vmem:[#allocation10 + $0x138] sm:$0xff]
    %v121 = vld [vmem:[#allocation10 + $0x140] sm:$0xff]
    %v122 = vld [vmem:[#allocation10 + $0x148] sm:$0xff]
    %v123 = vld [vmem:[#allocation10 + $0x150] sm:$0xff]
    %v124 = vld [vmem:[#allocation10 + $0x158] sm:$0xff]
    %v125 = vld [vmem:[#allocation10 + $0x160] sm:$0xff]
    %v126 = vld [vmem:[#allocation10 + $0x168] sm:$0xff]
    %v127 = vld [vmem:[#allocation10 + $0x170] sm:$0xff]
    %v128 = vld [vmem:[#allocation10 + $0x178] sm:$0xff]
    %v129 = vld [vmem:[#allocation10 + $0x180] sm:$0xff]
    %v130 = vld [vmem:[#allocation10 + $0x188] sm:$0xff]
    %v131 = vld [vmem:[#allocation10 + $0x190] sm:$0xff]
    %v132 = vld [vmem:[#allocation10 + $0x198] sm:$0xff]
    %v133 = vld [vmem:[#allocation10 + $0x1a0] sm:$0xff]
    %v134 = vld [vmem:[#allocation10 + $0x1a8] sm:$0xff]
    %v135 = vld [vmem:[#allocation10 + $0x1b0] sm:$0xff]
    %v136 = vld [vmem:[#allocation10 + $0x1b8] sm:$0xff]
    %v137 = vld [vmem:[#allocation10 + $0x1c0] sm:$0xff]
    %v138 = vld [vmem:[#allocation10 + $0x1c8] sm:$0xff]
    %v139 = vld [vmem:[#allocation10 + $0x1d0] sm:$0xff]
    %v140 = vld [vmem:[#allocation10 + $0x1d8] sm:$0xff]
    %v141 = vld [vmem:[#allocation10 + $0x1e0] sm:$0xff]
    %v142 = vld [vmem:[#allocation10 + $0x1e8] sm:$0xff]
    %v143 = vld [vmem:[#allocation10 + $0x1f0] sm:$0xff]
    %v144 = vld [vmem:[#allocation10 + $0x1f8] sm:$0xff]
    %v147 = vunpack.c.l.b16 %v79
    %v148 = vunpack.c.l.b16 %v80
    %v149 = vpack.c.b16 %v148, %v147
    %v215 = vunpack.c.l.b16 %v81
    %v216 = vunpack.c.h.b16 %v81
    %v217 = vunpack.c.l.b16 %v82
    %v218 = vunpack.c.h.b16 %v82
    %v219 = vunpack.c.l.b16 %v83
    %v220 = vunpack.c.h.b16 %v83
    %v221 = vunpack.c.l.b16 %v84
    %v222 = vunpack.c.h.b16 %v84
    %v223 = vunpack.c.l.b16 %v85
    %v224 = vunpack.c.h.b16 %v85
    %v225 = vunpack.c.l.b16 %v86
    %v226 = vunpack.c.h.b16 %v86
    %v227 = vunpack.c.l.b16 %v87
    %v228 = vunpack.c.h.b16 %v87
    %v229 = vunpack.c.l.b16 %v88
    %v230 = vunpack.c.h.b16 %v88
    %v231 = vunpack.c.l.b16 %v89
    %v232 = vunpack.c.h.b16 %v89
    %v233 = vunpack.c.l.b16 %v90
    %v234 = vunpack.c.h.b16 %v90
    %v235 = vunpack.c.l.b16 %v91
    %v236 = vunpack.c.h.b16 %v91
    %v237 = vunpack.c.l.b16 %v92
    %v238 = vunpack.c.h.b16 %v92
    %v239 = vunpack.c.l.b16 %v93
    %v240 = vunpack.c.h.b16 %v93
    %v241 = vunpack.c.l.b16 %v94
    %v242 = vunpack.c.h.b16 %v94
    %v243 = vunpack.c.l.b16 %v95
    %v244 = vunpack.c.h.b16 %v95
    %v245 = vunpack.c.l.b16 %v96
    %v246 = vunpack.c.h.b16 %v96
    %v247 = vunpack.c.l.b16 %v97
    %v248 = vunpack.c.h.b16 %v97
    %v249 = vunpack.c.l.b16 %v98
    %v250 = vunpack.c.h.b16 %v98
    %v251 = vunpack.c.l.b16 %v99
    %v252 = vunpack.c.h.b16 %v99
    %v253 = vunpack.c.l.b16 %v100
    %v254 = vunpack.c.h.b16 %v100
    %v255 = vunpack.c.l.b16 %v101
    %v256 = vunpack.c.h.b16 %v101
    %v257 = vunpack.c.l.b16 %v102
    %v258 = vunpack.c.h.b16 %v102
    %v259 = vunpack.c.l.b16 %v103
    %v260 = vunpack.c.h.b16 %v103
    %v261 = vunpack.c.l.b16 %v104
    %v262 = vunpack.c.h.b16 %v104
    %v263 = vunpack.c.l.b16 %v105
    %v264 = vunpack.c.h.b16 %v105
    %v265 = vunpack.c.l.b16 %v106
    %v266 = vunpack.c.h.b16 %v106
    %v267 = vunpack.c.l.b16 %v107
    %v268 = vunpack.c.h.b16 %v107
    %v269 = vunpack.c.l.b16 %v108
    %v270 = vunpack.c.h.b16 %v108
    %v271 = vunpack.c.l.b16 %v109
    %v272 = vunpack.c.h.b16 %v109
    %v273 = vunpack.c.l.b16 %v110
    %v274 = vunpack.c.h.b16 %v110
    %v275 = vunpack.c.l.b16 %v111
    %v276 = vunpack.c.h.b16 %v111
    %v277 = vunpack.c.l.b16 %v112
    %v278 = vunpack.c.h.b16 %v112
    %v279 = vunpack.c.l.b16 %v113
    %v280 = vunpack.c.h.b16 %v113
    %v281 = vunpack.c.l.b16 %v114
    %v282 = vunpack.c.h.b16 %v114
    %v283 = vunpack.c.l.b16 %v115
    %v284 = vunpack.c.h.b16 %v115
    %v285 = vunpack.c.l.b16 %v116
    %v286 = vunpack.c.h.b16 %v116
    %v287 = vunpack.c.l.b16 %v117
    %v288 = vunpack.c.h.b16 %v117
    %v289 = vunpack.c.l.b16 %v118
    %v290 = vunpack.c.h.b16 %v118
    %v291 = vunpack.c.l.b16 %v119
    %v292 = vunpack.c.h.b16 %v119
    %v293 = vunpack.c.l.b16 %v120
    %v294 = vunpack.c.h.b16 %v120
    %v295 = vunpack.c.l.b16 %v121
    %v296 = vunpack.c.h.b16 %v121
    %v297 = vunpack.c.l.b16 %v122
    %v298 = vunpack.c.h.b16 %v122
    %v299 = vunpack.c.l.b16 %v123
    %v300 = vunpack.c.h.b16 %v123
    %v301 = vunpack.c.l.b16 %v124
    %v302 = vunpack.c.h.b16 %v124
    %v303 = vunpack.c.l.b16 %v125
    %v304 = vunpack.c.h.b16 %v125
    %v305 = vunpack.c.l.b16 %v126
    %v306 = vunpack.c.h.b16 %v126
    %v307 = vunpack.c.l.b16 %v127
    %v308 = vunpack.c.h.b16 %v127
    %v309 = vunpack.c.l.b16 %v128
    %v310 = vunpack.c.h.b16 %v128
    %v311 = vunpack.c.l.b16 %v129
    %v312 = vunpack.c.h.b16 %v129
    %v313 = vunpack.c.l.b16 %v130
    %v314 = vunpack.c.h.b16 %v130
    %v315 = vunpack.c.l.b16 %v131
    %v316 = vunpack.c.h.b16 %v131
    %v317 = vunpack.c.l.b16 %v132
    %v318 = vunpack.c.h.b16 %v132
    %v319 = vunpack.c.l.b16 %v133
    %v320 = vunpack.c.h.b16 %v133
    %v321 = vunpack.c.l.b16 %v134
    %v322 = vunpack.c.h.b16 %v134
    %v323 = vunpack.c.l.b16 %v135
    %v324 = vunpack.c.h.b16 %v135
    %v325 = vunpack.c.l.b16 %v136
    %v326 = vunpack.c.h.b16 %v136
    %v327 = vunpack.c.l.b16 %v137
    %v328 = vunpack.c.h.b16 %v137
    %v329 = vunpack.c.l.b16 %v138
    %v330 = vunpack.c.h.b16 %v138
    %v331 = vunpack.c.l.b16 %v139
    %v332 = vunpack.c.h.b16 %v139
    %v333 = vunpack.c.l.b16 %v140
    %v334 = vunpack.c.h.b16 %v140
    %v335 = vunpack.c.l.b16 %v141
    %v336 = vunpack.c.h.b16 %v141
    %v337 = vunpack.c.l.b16 %v142
    %v338 = vunpack.c.h.b16 %v142
    %v339 = vunpack.c.l.b16 %v143
    %v340 = vunpack.c.h.b16 %v143
    %v341 = vunpack.c.l.b16 %v144
    %v342 = vunpack.c.h.b16 %v144
    %v343 = vpack.c.b16 %v223, %v215
    %v344 = vpack.c.b16 %v224, %v216
    %v345 = vpack.c.b16 %v225, %v217
    %v346 = vpack.c.b16 %v226, %v218
    %v347 = vpack.c.b16 %v227, %v219
    %v348 = vpack.c.b16 %v228, %v220
    %v349 = vpack.c.b16 %v229, %v221
    %v350 = vpack.c.b16 %v230, %v222
    %v351 = vpack.c.b16 %v239, %v231
    %v352 = vpack.c.b16 %v240, %v232
    %v353 = vpack.c.b16 %v241, %v233
    %v354 = vpack.c.b16 %v242, %v234
    %v355 = vpack.c.b16 %v243, %v235
    %v356 = vpack.c.b16 %v244, %v236
    %v357 = vpack.c.b16 %v245, %v237
    %v358 = vpack.c.b16 %v246, %v238
    %v359 = vpack.c.b16 %v255, %v247
    %v360 = vpack.c.b16 %v256, %v248
    %v361 = vpack.c.b16 %v257, %v249
    %v362 = vpack.c.b16 %v258, %v250
    %v363 = vpack.c.b16 %v259, %v251
    %v364 = vpack.c.b16 %v260, %v252
    %v365 = vpack.c.b16 %v261, %v253
    %v366 = vpack.c.b16 %v262, %v254
    %v367 = vpack.c.b16 %v271, %v263
    %v368 = vpack.c.b16 %v272, %v264
    %v369 = vpack.c.b16 %v273, %v265
    %v370 = vpack.c.b16 %v274, %v266
    %v371 = vpack.c.b16 %v275, %v267
    %v372 = vpack.c.b16 %v276, %v268
    %v373 = vpack.c.b16 %v277, %v269
    %v374 = vpack.c.b16 %v278, %v270
    %v375 = vpack.c.b16 %v287, %v279
    %v376 = vpack.c.b16 %v288, %v280
    %v377 = vpack.c.b16 %v289, %v281
    %v378 = vpack.c.b16 %v290, %v282
    %v379 = vpack.c.b16 %v291, %v283
    %v380 = vpack.c.b16 %v292, %v284
    %v381 = vpack.c.b16 %v293, %v285
    %v382 = vpack.c.b16 %v294, %v286
    %v383 = vpack.c.b16 %v303, %v295
    %v384 = vpack.c.b16 %v304, %v296
    %v385 = vpack.c.b16 %v305, %v297
    %v386 = vpack.c.b16 %v306, %v298
    %v387 = vpack.c.b16 %v307, %v299
    %v388 = vpack.c.b16 %v308, %v300
    %v389 = vpack.c.b16 %v309, %v301
    %v390 = vpack.c.b16 %v310, %v302
    %v391 = vpack.c.b16 %v319, %v311
    %v392 = vpack.c.b16 %v320, %v312
    %v393 = vpack.c.b16 %v321, %v313
    %v394 = vpack.c.b16 %v322, %v314
    %v395 = vpack.c.b16 %v323, %v315
    %v396 = vpack.c.b16 %v324, %v316
    %v397 = vpack.c.b16 %v325, %v317
    %v398 = vpack.c.b16 %v326, %v318
    %v399 = vpack.c.b16 %v335, %v327
    %v400 = vpack.c.b16 %v336, %v328
    %v401 = vpack.c.b16 %v337, %v329
    %v402 = vpack.c.b16 %v338, %v330
    %v403 = vpack.c.b16 %v339, %v331
    %v404 = vpack.c.b16 %v340, %v332
    %v405 = vpack.c.b16 %v341, %v333
    %v406 = vpack.c.b16 %v342, %v334
    %471 = vmatprep.subr.bf16.mxu0 %v344
    %472 = vmatpush1.bf16.msra.mxu0 %v343
    %473 = vmatprep.subr.bf16.mxu0 %v352
    %474 = vmatpush1.bf16.msra.mxu0 %v351
    %475 = vmatprep.subr.bf16.mxu0 %v360
    %476 = vmatpush1.bf16.msra.mxu0 %v359
    %477 = vmatprep.subr.bf16.mxu0 %v368
    %478 = vmatpush1.bf16.msra.mxu0 %v367
    %479 = vmatprep.subr.bf16.mxu0 %v376
    %480 = vmatpush1.bf16.msra.mxu0 %v375
    %481 = vmatprep.subr.bf16.mxu0 %v384
    %482 = vmatpush1.bf16.msra.mxu0 %v383
    %483 = vmatprep.subr.bf16.mxu0 %v392
    %484 = vmatpush1.bf16.msra.mxu0 %v391
    %485 = vmatprep.subr.bf16.mxu0 %v400
    %486 = vmatpush1.bf16.msra.mxu0 %v399
    %487 = vmatprep.subr.bf16.mxu0 0
    %488 = vmatpush1.bf16.msra.mxu0 0
    %489 = vmatprep.subr.bf16.mxu0 0
    %490 = vmatpush1.bf16.msra.mxu0 0
    %491 = vmatprep.subr.bf16.mxu0 0
    %492 = vmatpush1.bf16.msra.mxu0 0
    %493 = vmatprep.subr.bf16.mxu0 0
    %494 = vmatpush1.bf16.msra.mxu0 0
    %495 = vmatprep.subr.bf16.mxu0 0
    %496 = vmatpush1.bf16.msra.mxu0 0
    %497 = vmatprep.subr.bf16.mxu0 0
    %498 = vmatpush1.bf16.msra.mxu0 0
    %499 = vmatprep.subr.bf16.mxu0 0
    %500 = vmatpush1.bf16.msra.mxu0 0
    %501 = vmatprep.subr.bf16.mxu0 0
    %502 = vmatpush1.bf16.msra.mxu0 0
    %503 = vmatprep.mubr.bf16.mxu0 0
    %504 = vmatmul.mubr.bf16.gmra.mrb[0].mxu0 %v149
    %v505 = vpop.f32.mrb[0].mxu0
    %v506 = vadd.f32 0.0, %v505
    %v507 = vpop.f32.mrb[0].mxu0
    %v508 = vadd.f32 0.0, %v507
    %v509 = vpop.f32.mrb[0].mxu0
    %v510 = vadd.f32 0.0, %v509
    %v511 = vpop.f32.mrb[0].mxu0
    %v512 = vadd.f32 0.0, %v511
    %513 = vdwg.mxu0
    %514 = vmatprep.subr.bf16.mxu0 %v346
    %515 = vmatpush1.bf16.msra.mxu0 %v345
    %516 = vmatprep.subr.bf16.mxu0 %v354
    %517 = vmatpush1.bf16.msra.mxu0 %v353
    %518 = vmatprep.subr.bf16.mxu0 %v362
    %519 = vmatpush1.bf16.msra.mxu0 %v361
    %520 = vmatprep.subr.bf16.mxu0 %v370
    %521 = vmatpush1.bf16.msra.mxu0 %v369
    %522 = vmatprep.subr.bf16.mxu0 %v378
    %523 = vmatpush1.bf16.msra.mxu0 %v377
    %524 = vmatprep.subr.bf16.mxu0 %v386
    %525 = vmatpush1.bf16.msra.mxu0 %v385
    %526 = vmatprep.subr.bf16.mxu0 %v394
    %527 = vmatpush1.bf16.msra.mxu0 %v393
    %528 = vmatprep.subr.bf16.mxu0 %v402
    %529 = vmatpush1.bf16.msra.mxu0 %v401
    %530 = vmatprep.subr.bf16.mxu0 0
    %531 = vmatpush1.bf16.msra.mxu0 0
    %532 = vmatprep.subr.bf16.mxu0 0
    %533 = vmatpush1.bf16.msra.mxu0 0
    %534 = vmatprep.subr.bf16.mxu0 0
    %535 = vmatpush1.bf16.msra.mxu0 0
    %536 = vmatprep.subr.bf16.mxu0 0
    %537 = vmatpush1.bf16.msra.mxu0 0
    %538 = vmatprep.subr.bf16.mxu0 0
    %539 = vmatpush1.bf16.msra.mxu0 0
    %540 = vmatprep.subr.bf16.mxu0 0
    %541 = vmatpush1.bf16.msra.mxu0 0
    %542 = vmatprep.subr.bf16.mxu0 0
    %543 = vmatpush1.bf16.msra.mxu0 0
    %544 = vmatprep.subr.bf16.mxu0 0
    %545 = vmatpush1.bf16.msra.mxu0 0
    %546 = vmatprep.mubr.bf16.mxu0 0
    %547 = vmatmul.mubr.bf16.gmra.mrb[0].mxu0 %v149
    %v548 = vpop.f32.mrb[0].mxu0
    %v549 = vadd.f32 0.0, %v548
    %v550 = vpop.f32.mrb[0].mxu0
    %v551 = vadd.f32 0.0, %v550
    %v552 = vpop.f32.mrb[0].mxu0
    %v553 = vadd.f32 0.0, %v552
    %v554 = vpop.f32.mrb[0].mxu0
    %v555 = vadd.f32 0.0, %v554
    %556 = vdwg.mxu0
    %557 = vmatprep.subr.bf16.mxu0 %v348
    %558 = vmatpush1.bf16.msra.mxu0 %v347
    %559 = vmatprep.subr.bf16.mxu0 %v356
    %560 = vmatpush1.bf16.msra.mxu0 %v355
    %561 = vmatprep.subr.bf16.mxu0 %v364
    %562 = vmatpush1.bf16.msra.mxu0 %v363
    %563 = vmatprep.subr.bf16.mxu0 %v372
    %564 = vmatpush1.bf16.msra.mxu0 %v371
    %565 = vmatprep.subr.bf16.mxu0 %v380
    %566 = vmatpush1.bf16.msra.mxu0 %v379
    %567 = vmatprep.subr.bf16.mxu0 %v388
    %568 = vmatpush1.bf16.msra.mxu0 %v387
    %569 = vmatprep.subr.bf16.mxu0 %v396
    %570 = vmatpush1.bf16.msra.mxu0 %v395
    %571 = vmatprep.subr.bf16.mxu0 %v404
    %572 = vmatpush1.bf16.msra.mxu0 %v403
    %573 = vmatprep.subr.bf16.mxu0 0
    %574 = vmatpush1.bf16.msra.mxu0 0
    %575 = vmatprep.subr.bf16.mxu0 0
    %576 = vmatpush1.bf16.msra.mxu0 0
    %577 = vmatprep.subr.bf16.mxu0 0
    %578 = vmatpush1.bf16.msra.mxu0 0
    %579 = vmatprep.subr.bf16.mxu0 0
    %580 = vmatpush1.bf16.msra.mxu0 0
    %581 = vmatprep.subr.bf16.mxu0 0
    %582 = vmatpush1.bf16.msra.mxu0 0
    %583 = vmatprep.subr.bf16.mxu0 0
    %584 = vmatpush1.bf16.msra.mxu0 0
    %585 = vmatprep.subr.bf16.mxu0 0
    %586 = vmatpush1.bf16.msra.mxu0 0
    %587 = vmatprep.subr.bf16.mxu0 0
    %588 = vmatpush1.bf16.msra.mxu0 0
    %589 = vmatprep.mubr.bf16.mxu0 0
    %590 = vmatmul.mubr.bf16.gmra.mrb[0].mxu0 %v149
    %v591 = vpop.f32.mrb[0].mxu0
    %v592 = vadd.f32 0.0, %v591
    %v593 = vpop.f32.mrb[0].mxu0
    %v594 = vadd.f32 0.0, %v593
    %v595 = vpop.f32.mrb[0].mxu0
    %v596 = vadd.f32 0.0, %v595
    %v597 = vpop.f32.mrb[0].mxu0
    %v598 = vadd.f32 0.0, %v597
    %599 = vdwg.mxu0
    %600 = vmatprep.subr.bf16.mxu0 %v350
    %601 = vmatpush1.bf16.msra.mxu0 %v349
    %602 = vmatprep.subr.bf16.mxu0 %v358
    %603 = vmatpush1.bf16.msra.mxu0 %v357
    %604 = vmatprep.subr.bf16.mxu0 %v366
    %605 = vmatpush1.bf16.msra.mxu0 %v365
    %606 = vmatprep.subr.bf16.mxu0 %v374
    %607 = vmatpush1.bf16.msra.mxu0 %v373
    %608 = vmatprep.subr.bf16.mxu0 %v382
    %609 = vmatpush1.bf16.msra.mxu0 %v381
    %610 = vmatprep.subr.bf16.mxu0 %v390
    %611 = vmatpush1.bf16.msra.mxu0 %v389
    %612 = vmatprep.subr.bf16.mxu0 %v398
    %613 = vmatpush1.bf16.msra.mxu0 %v397
    %614 = vmatprep.subr.bf16.mxu0 %v406
    %615 = vmatpush1.bf16.msra.mxu0 %v405
    %616 = vmatprep.subr.bf16.mxu0 0
    %617 = vmatpush1.bf16.msra.mxu0 0
    %618 = vmatprep.subr.bf16.mxu0 0
    %619 = vmatpush1.bf16.msra.mxu0 0
    %620 = vmatprep.subr.bf16.mxu0 0
    %621 = vmatpush1.bf16.msra.mxu0 0
    %622 = vmatprep.subr.bf16.mxu0 0
    %623 = vmatpush1.bf16.msra.mxu0 0
    %624 = vmatprep.subr.bf16.mxu0 0
    %625 = vmatpush1.bf16.msra.mxu0 0
    %626 = vmatprep.subr.bf16.mxu0 0
    %627 = vmatpush1.bf16.msra.mxu0 0
    %628 = vmatprep.subr.bf16.mxu0 0
    %629 = vmatpush1.bf16.msra.mxu0 0
    %630 = vmatprep.subr.bf16.mxu0 0
    %631 = vmatpush1.bf16.msra.mxu0 0
    %632 = vmatprep.mubr.bf16.mxu0 0
    %633 = vmatmul.mubr.bf16.gmra.mrb[0].mxu0 %v149
    %v634 = vpop.f32.mrb[0].mxu0
    %v635 = vadd.f32 0.0, %v634
    %v636 = vpop.f32.mrb[0].mxu0
    %v637 = vadd.f32 0.0, %v636
    %v638 = vpop.f32.mrb[0].mxu0
    %v639 = vadd.f32 0.0, %v638
    %v640 = vpop.f32.mrb[0].mxu0
    %v641 = vadd.f32 0.0, %v640
    %642 = vdwg.mxu0
    %643 = vst [vmem:[#allocation2] sm:$0x3] %v506
    %v645 = vrot.slane %v508, 6
    %647 = vst [vmem:[#allocation2] sm:$0xc] %v645
    %v649 = vrot.slane %v549, 4
    %651 = vst [vmem:[#allocation2] sm:$0x30] %v649
    %v653 = vrot.slane %v551, 2
    %655 = vst [vmem:[#allocation2] sm:$0xc0] %v653
    %656 = vst [vmem:[#allocation2 + $0x40] sm:$0x3] %v592
    %v658 = vrot.slane %v594, 6
    %660 = vst [vmem:[#allocation2 + $0x40] sm:$0xc] %v658
    %v662 = vrot.slane %v635, 4
    %664 = vst [vmem:[#allocation2 + $0x40] sm:$0x30] %v662
    %v666 = vrot.slane %v637, 2
    %668 = vst [vmem:[#allocation2 + $0x40] sm:$0xc0] %v666
    %v670 = vrot.slane %v506, 2
    %672 = vst [vmem:[#allocation2 + $0x8] sm:$0x3] %v670
    %673 = vst [vmem:[#allocation2 + $0x8] sm:$0xc] %v508
    %v674 = vrot.slane %v549, 6
    %676 = vst [vmem:[#allocation2 + $0x8] sm:$0x30] %v674
    %v677 = vrot.slane %v551, 4
    %679 = vst [vmem:[#allocation2 + $0x8] sm:$0xc0] %v677
    %v681 = vrot.slane %v592, 2
    %683 = vst [vmem:[#allocation2 + $0x48] sm:$0x3] %v681
    %684 = vst [vmem:[#allocation2 + $0x48] sm:$0xc] %v594
    %v685 = vrot.slane %v635, 6
    %687 = vst [vmem:[#allocation2 + $0x48] sm:$0x30] %v685
    %v688 = vrot.slane %v637, 4
    %690 = vst [vmem:[#allocation2 + $0x48] sm:$0xc0] %v688
    %v691 = vrot.slane %v506, 4
    %693 = vst [vmem:[#allocation2 + $0x10] sm:$0x3] %v691
    %v694 = vrot.slane %v508, 2
    %696 = vst [vmem:[#allocation2 + $0x10] sm:$0xc] %v694
    %697 = vst [vmem:[#allocation2 + $0x10] sm:$0x30] %v549
    %v698 = vrot.slane %v551, 6
    %700 = vst [vmem:[#allocation2 + $0x10] sm:$0xc0] %v698
    %v701 = vrot.slane %v592, 4
    %703 = vst [vmem:[#allocation2 + $0x50] sm:$0x3] %v701
    %v704 = vrot.slane %v594, 2
    %706 = vst [vmem:[#allocation2 + $0x50] sm:$0xc] %v704
    %707 = vst [vmem:[#allocation2 + $0x50] sm:$0x30] %v635
    %v708 = vrot.slane %v637, 6
    %710 = vst [vmem:[#allocation2 + $0x50] sm:$0xc0] %v708
    %v711 = vrot.slane %v506, 6
    %713 = vst [vmem:[#allocation2 + $0x18] sm:$0x3] %v711
    %v714 = vrot.slane %v508, 4
    %716 = vst [vmem:[#allocation2 + $0x18] sm:$0xc] %v714
    %v717 = vrot.slane %v549, 2
    %719 = vst [vmem:[#allocation2 + $0x18] sm:$0x30] %v717
    %720 = vst [vmem:[#allocation2 + $0x18] sm:$0xc0] %v551
    %v721 = vrot.slane %v592, 6
    %723 = vst [vmem:[#allocation2 + $0x58] sm:$0x3] %v721
    %v724 = vrot.slane %v594, 4
    %726 = vst [vmem:[#allocation2 + $0x58] sm:$0xc] %v724
    %v727 = vrot.slane %v635, 2
    %729 = vst [vmem:[#allocation2 + $0x58] sm:$0x30] %v727
    %730 = vst [vmem:[#allocation2 + $0x58] sm:$0xc0] %v637
    %731 = vst [vmem:[#allocation2 + $0x20] sm:$0x3] %v510
    %v733 = vrot.slane %v512, 6
    %735 = vst [vmem:[#allocation2 + $0x20] sm:$0xc] %v733
    %v737 = vrot.slane %v553, 4
    %739 = vst [vmem:[#allocation2 + $0x20] sm:$0x30] %v737
    %v741 = vrot.slane %v555, 2
    %743 = vst [vmem:[#allocation2 + $0x20] sm:$0xc0] %v741
    %744 = vst [vmem:[#allocation2 + $0x60] sm:$0x3] %v596
    %v746 = vrot.slane %v598, 6
    %748 = vst [vmem:[#allocation2 + $0x60] sm:$0xc] %v746
    %v750 = vrot.slane %v639, 4
    %752 = vst [vmem:[#allocation2 + $0x60] sm:$0x30] %v750
    %v754 = vrot.slane %v641, 2
    %756 = vst [vmem:[#allocation2 + $0x60] sm:$0xc0] %v754
    %v758 = vrot.slane %v510, 2
    %760 = vst [vmem:[#allocation2 + $0x28] sm:$0x3] %v758
    %761 = vst [vmem:[#allocation2 + $0x28] sm:$0xc] %v512
    %v762 = vrot.slane %v553, 6
    %764 = vst [vmem:[#allocation2 + $0x28] sm:$0x30] %v762
    %v765 = vrot.slane %v555, 4
    %767 = vst [vmem:[#allocation2 + $0x28] sm:$0xc0] %v765
    %v769 = vrot.slane %v596, 2
    %771 = vst [vmem:[#allocation2 + $0x68] sm:$0x3] %v769
    %772 = vst [vmem:[#allocation2 + $0x68] sm:$0xc] %v598
    %v773 = vrot.slane %v639, 6
    %775 = vst [vmem:[#allocation2 + $0x68] sm:$0x30] %v773
    %v776 = vrot.slane %v641, 4
    %778 = vst [vmem:[#allocation2 + $0x68] sm:$0xc0] %v776
    %v779 = vrot.slane %v510, 4
    %781 = vst [vmem:[#allocation2 + $0x30] sm:$0x3] %v779
    %v782 = vrot.slane %v512, 2
    %784 = vst [vmem:[#allocation2 + $0x30] sm:$0xc] %v782
    %785 = vst [vmem:[#allocation2 + $0x30] sm:$0x30] %v553
    %v786 = vrot.slane %v555, 6
    %788 = vst [vmem:[#allocation2 + $0x30] sm:$0xc0] %v786
    %v789 = vrot.slane %v596, 4
    %791 = vst [vmem:[#allocation2 + $0x70] sm:$0x3] %v789
    %v792 = vrot.slane %v598, 2
    %794 = vst [vmem:[#allocation2 + $0x70] sm:$0xc] %v792
    %795 = vst [vmem:[#allocation2 + $0x70] sm:$0x30] %v639
    %v796 = vrot.slane %v641, 6
    %798 = vst [vmem:[#allocation2 + $0x70] sm:$0xc0] %v796
    %v799 = vrot.slane %v510, 6
    %801 = vst [vmem:[#allocation2 + $0x38] sm:$0x3] %v799
    %v802 = vrot.slane %v512, 4
    %804 = vst [vmem:[#allocation2 + $0x38] sm:$0xc] %v802
    %v805 = vrot.slane %v553, 2
    %807 = vst [vmem:[#allocation2 + $0x38] sm:$0x30] %v805
    %808 = vst [vmem:[#allocation2 + $0x38] sm:$0xc0] %v555
    %v809 = vrot.slane %v596, 6
    %811 = vst [vmem:[#allocation2 + $0x78] sm:$0x3] %v809
    %v812 = vrot.slane %v598, 4
    %814 = vst [vmem:[#allocation2 + $0x78] sm:$0xc] %v812
    %v815 = vrot.slane %v639, 2
    %817 = vst [vmem:[#allocation2 + $0x78] sm:$0x30] %v815
    %818 = vst [vmem:[#allocation2 + $0x78] sm:$0xc0] %v641
    %v819 = vld [vmem:[#allocation2] sm:$0xff]
    %v820 = vld [vmem:[#allocation2 + $0x8] sm:$0xff]
    %v821 = vld [vmem:[#allocation2 + $0x10] sm:$0xff]
    %v822 = vld [vmem:[#allocation2 + $0x18] sm:$0xff]
    %v823 = vld [vmem:[#allocation2 + $0x20] sm:$0xff]
    %v824 = vld [vmem:[#allocation2 + $0x28] sm:$0xff]
    %v825 = vld [vmem:[#allocation2 + $0x30] sm:$0xff]
    %v826 = vld [vmem:[#allocation2 + $0x38] sm:$0xff]
    %v827 = vld [vmem:[#allocation2 + $0x40] sm:$0xff]
    %v828 = vld [vmem:[#allocation2 + $0x48] sm:$0xff]
    %v829 = vld [vmem:[#allocation2 + $0x50] sm:$0xff]
    %v830 = vld [vmem:[#allocation2 + $0x58] sm:$0xff]
    %v831 = vld [vmem:[#allocation2 + $0x60] sm:$0xff]
    %v832 = vld [vmem:[#allocation2 + $0x68] sm:$0xff]
    %v833 = vld [vmem:[#allocation2 + $0x70] sm:$0xff]
    %v834 = vld [vmem:[#allocation2 + $0x78] sm:$0xff]
    %v835 = vpack.c.bf16 %v827, %v819
    %v836 = vpack.c.bf16 %v828, %v820
    %v837 = vpack.c.bf16 %v829, %v821
    %v838 = vpack.c.bf16 %v830, %v822
    %v839 = vpack.c.bf16 %v831, %v823
    %v840 = vpack.c.bf16 %v832, %v824
    %v841 = vpack.c.bf16 %v833, %v825
    %v842 = vpack.c.bf16 %v834, %v826
    %v843 = vld [vmem:[#allocation11] sm:$0xff]
    %v844 = vld [vmem:[#allocation11 + $0x8] sm:$0xff]
    %v845 = vld [vmem:[#allocation11 + $0x10] sm:$0xff]
    %v846 = vld [vmem:[#allocation11 + $0x18] sm:$0xff]
    %v847 = vld [vmem:[#allocation11 + $0x20] sm:$0xff]
    %v848 = vld [vmem:[#allocation11 + $0x28] sm:$0xff]
    %v849 = vld [vmem:[#allocation11 + $0x30] sm:$0xff]
    %v850 = vld [vmem:[#allocation11 + $0x38] sm:$0xff]
    %v851 = vld [vmem:[#allocation11 + $0x40] sm:$0xff]
    %v852 = vld [vmem:[#allocation11 + $0x48] sm:$0xff]
    %v853 = vld [vmem:[#allocation11 + $0x50] sm:$0xff]
    %v854 = vld [vmem:[#allocation11 + $0x58] sm:$0xff]
    %v855 = vld [vmem:[#allocation11 + $0x60] sm:$0xff]
    %v856 = vld [vmem:[#allocation11 + $0x68] sm:$0xff]
    %v857 = vld [vmem:[#allocation11 + $0x70] sm:$0xff]
    %v858 = vld [vmem:[#allocation11 + $0x78] sm:$0xff]
    %v859 = vld [vmem:[#allocation11 + $0x80] sm:$0xff]
    %v860 = vld [vmem:[#allocation11 + $0x88] sm:$0xff]
    %v861 = vld [vmem:[#allocation11 + $0x90] sm:$0xff]
    %v862 = vld [vmem:[#allocation11 + $0x98] sm:$0xff]
    %v863 = vld [vmem:[#allocation11 + $0xa0] sm:$0xff]
    %v864 = vld [vmem:[#allocation11 + $0xa8] sm:$0xff]
    %v865 = vld [vmem:[#allocation11 + $0xb0] sm:$0xff]
    %v866 = vld [vmem:[#allocation11 + $0xb8] sm:$0xff]
    %v867 = vld [vmem:[#allocation11 + $0xc0] sm:$0xff]
    %v868 = vld [vmem:[#allocation11 + $0xc8] sm:$0xff]
    %v869 = vld [vmem:[#allocation11 + $0xd0] sm:$0xff]
    %v870 = vld [vmem:[#allocation11 + $0xd8] sm:$0xff]
    %v871 = vld [vmem:[#allocation11 + $0xe0] sm:$0xff]
    %v872 = vld [vmem:[#allocation11 + $0xe8] sm:$0xff]
    %v873 = vld [vmem:[#allocation11 + $0xf0] sm:$0xff]
    %v874 = vld [vmem:[#allocation11 + $0xf8] sm:$0xff]
    %v875 = vld [vmem:[#allocation11 + $0x100] sm:$0xff]
    %v876 = vld [vmem:[#allocation11 + $0x108] sm:$0xff]
    %v877 = vld [vmem:[#allocation11 + $0x110] sm:$0xff]
    %v878 = vld [vmem:[#allocation11 + $0x118] sm:$0xff]
    %v879 = vld [vmem:[#allocation11 + $0x120] sm:$0xff]
    %v880 = vld [vmem:[#allocation11 + $0x128] sm:$0xff]
    %v881 = vld [vmem:[#allocation11 + $0x130] sm:$0xff]
    %v882 = vld [vmem:[#allocation11 + $0x138] sm:$0xff]
    %v883 = vld [vmem:[#allocation11 + $0x140] sm:$0xff]
    %v884 = vld [vmem:[#allocation11 + $0x148] sm:$0xff]
    %v885 = vld [vmem:[#allocation11 + $0x150] sm:$0xff]
    %v886 = vld [vmem:[#allocation11 + $0x158] sm:$0xff]
    %v887 = vld [vmem:[#allocation11 + $0x160] sm:$0xff]
    %v888 = vld [vmem:[#allocation11 + $0x168] sm:$0xff]
    %v889 = vld [vmem:[#allocation11 + $0x170] sm:$0xff]
    %v890 = vld [vmem:[#allocation11 + $0x178] sm:$0xff]
    %v891 = vld [vmem:[#allocation11 + $0x180] sm:$0xff]
    %v892 = vld [vmem:[#allocation11 + $0x188] sm:$0xff]
    %v893 = vld [vmem:[#allocation11 + $0x190] sm:$0xff]
    %v894 = vld [vmem:[#allocation11 + $0x198] sm:$0xff]
    %v895 = vld [vmem:[#allocation11 + $0x1a0] sm:$0xff]
    %v896 = vld [vmem:[#allocation11 + $0x1a8] sm:$0xff]
    %v897 = vld [vmem:[#allocation11 + $0x1b0] sm:$0xff]
    %v898 = vld [vmem:[#allocation11 + $0x1b8] sm:$0xff]
    %v899 = vld [vmem:[#allocation11 + $0x1c0] sm:$0xff]
    %v900 = vld [vmem:[#allocation11 + $0x1c8] sm:$0xff]
    %v901 = vld [vmem:[#allocation11 + $0x1d0] sm:$0xff]
    %v902 = vld [vmem:[#allocation11 + $0x1d8] sm:$0xff]
    %v903 = vld [vmem:[#allocation11 + $0x1e0] sm:$0xff]
    %v904 = vld [vmem:[#allocation11 + $0x1e8] sm:$0xff]
    %v905 = vld [vmem:[#allocation11 + $0x1f0] sm:$0xff]
    %v906 = vld [vmem:[#allocation11 + $0x1f8] sm:$0xff]
    %v907 = vld [vmem:[#allocation11 + $0x200] sm:$0xff]
    %v908 = vld [vmem:[#allocation11 + $0x208] sm:$0xff]
    %v909 = vld [vmem:[#allocation11 + $0x210] sm:$0xff]
    %v910 = vld [vmem:[#allocation11 + $0x218] sm:$0xff]
    %v911 = vld [vmem:[#allocation11 + $0x220] sm:$0xff]
    %v912 = vld [vmem:[#allocation11 + $0x228] sm:$0xff]
    %v913 = vld [vmem:[#allocation11 + $0x230] sm:$0xff]
    %v914 = vld [vmem:[#allocation11 + $0x238] sm:$0xff]
    %v915 = vld [vmem:[#allocation11 + $0x240] sm:$0xff]
    %v916 = vld [vmem:[#allocation11 + $0x248] sm:$0xff]
    %v917 = vld [vmem:[#allocation11 + $0x250] sm:$0xff]
    %v918 = vld [vmem:[#allocation11 + $0x258] sm:$0xff]
    %v919 = vld [vmem:[#allocation11 + $0x260] sm:$0xff]
    %v920 = vld [vmem:[#allocation11 + $0x268] sm:$0xff]
    %v921 = vld [vmem:[#allocation11 + $0x270] sm:$0xff]
    %v922 = vld [vmem:[#allocation11 + $0x278] sm:$0xff]
    %v923 = vld [vmem:[#allocation11 + $0x280] sm:$0xff]
    %v924 = vld [vmem:[#allocation11 + $0x288] sm:$0xff]
    %v925 = vld [vmem:[#allocation11 + $0x290] sm:$0xff]
    %v926 = vld [vmem:[#allocation11 + $0x298] sm:$0xff]
    %v927 = vld [vmem:[#allocation11 + $0x2a0] sm:$0xff]
    %v928 = vld [vmem:[#allocation11 + $0x2a8] sm:$0xff]
    %v929 = vld [vmem:[#allocation11 + $0x2b0] sm:$0xff]
    %v930 = vld [vmem:[#allocation11 + $0x2b8] sm:$0xff]
    %v931 = vld [vmem:[#allocation11 + $0x2c0] sm:$0xff]
    %v932 = vld [vmem:[#allocation11 + $0x2c8] sm:$0xff]
    %v933 = vld [vmem:[#allocation11 + $0x2d0] sm:$0xff]
    %v934 = vld [vmem:[#allocation11 + $0x2d8] sm:$0xff]
    %v935 = vld [vmem:[#allocation11 + $0x2e0] sm:$0xff]
    %v936 = vld [vmem:[#allocation11 + $0x2e8] sm:$0xff]
    %v937 = vld [vmem:[#allocation11 + $0x2f0] sm:$0xff]
    %v938 = vld [vmem:[#allocation11 + $0x2f8] sm:$0xff]
    %v939 = vld [vmem:[#allocation11 + $0x300] sm:$0xff]
    %v940 = vld [vmem:[#allocation11 + $0x308] sm:$0xff]
    %v941 = vld [vmem:[#allocation11 + $0x310] sm:$0xff]
    %v942 = vld [vmem:[#allocation11 + $0x318] sm:$0xff]
    %v943 = vld [vmem:[#allocation11 + $0x320] sm:$0xff]
    %v944 = vld [vmem:[#allocation11 + $0x328] sm:$0xff]
    %v945 = vld [vmem:[#allocation11 + $0x330] sm:$0xff]
    %v946 = vld [vmem:[#allocation11 + $0x338] sm:$0xff]
    %v947 = vld [vmem:[#allocation11 + $0x340] sm:$0xff]
    %v948 = vld [vmem:[#allocation11 + $0x348] sm:$0xff]
    %v949 = vld [vmem:[#allocation11 + $0x350] sm:$0xff]
    %v950 = vld [vmem:[#allocation11 + $0x358] sm:$0xff]
    %v951 = vld [vmem:[#allocation11 + $0x360] sm:$0xff]
    %v952 = vld [vmem:[#allocation11 + $0x368] sm:$0xff]
    %v953 = vld [vmem:[#allocation11 + $0x370] sm:$0xff]
    %v954 = vld [vmem:[#allocation11 + $0x378] sm:$0xff]
    %v955 = vld [vmem:[#allocation11 + $0x380] sm:$0xff]
    %v956 = vld [vmem:[#allocation11 + $0x388] sm:$0xff]
    %v957 = vld [vmem:[#allocation11 + $0x390] sm:$0xff]
    %v958 = vld [vmem:[#allocation11 + $0x398] sm:$0xff]
    %v959 = vld [vmem:[#allocation11 + $0x3a0] sm:$0xff]
    %v960 = vld [vmem:[#allocation11 + $0x3a8] sm:$0xff]
    %v961 = vld [vmem:[#allocation11 + $0x3b0] sm:$0xff]
    %v962 = vld [vmem:[#allocation11 + $0x3b8] sm:$0xff]
    %v963 = vld [vmem:[#allocation11 + $0x3c0] sm:$0xff]
    %v964 = vld [vmem:[#allocation11 + $0x3c8] sm:$0xff]
    %v965 = vld [vmem:[#allocation11 + $0x3d0] sm:$0xff]
    %v966 = vld [vmem:[#allocation11 + $0x3d8] sm:$0xff]
    %v967 = vld [vmem:[#allocation11 + $0x3e0] sm:$0xff]
    %v968 = vld [vmem:[#allocation11 + $0x3e8] sm:$0xff]
    %v969 = vld [vmem:[#allocation11 + $0x3f0] sm:$0xff]
    %v970 = vld [vmem:[#allocation11 + $0x3f8] sm:$0xff]
    %v1099 = vunpack.c.l.b16 %v843
    %v1100 = vunpack.c.h.b16 %v843
    %v1101 = vunpack.c.l.b16 %v844
    %v1102 = vunpack.c.h.b16 %v844
    %v1103 = vunpack.c.l.b16 %v845
    %v1104 = vunpack.c.h.b16 %v845
    %v1105 = vunpack.c.l.b16 %v846
    %v1106 = vunpack.c.h.b16 %v846
    %v1107 = vunpack.c.l.b16 %v847
    %v1108 = vunpack.c.h.b16 %v847
    %v1109 = vunpack.c.l.b16 %v848
    %v1110 = vunpack.c.h.b16 %v848
    %v1111 = vunpack.c.l.b16 %v849
    %v1112 = vunpack.c.h.b16 %v849
    %v1113 = vunpack.c.l.b16 %v850
    %v1114 = vunpack.c.h.b16 %v850
    %v1115 = vunpack.c.l.b16 %v851
    %v1116 = vunpack.c.h.b16 %v851
    %v1117 = vunpack.c.l.b16 %v852
    %v1118 = vunpack.c.h.b16 %v852
    %v1119 = vunpack.c.l.b16 %v853
    %v1120 = vunpack.c.h.b16 %v853
    %v1121 = vunpack.c.l.b16 %v854
    %v1122 = vunpack.c.h.b16 %v854
    %v1123 = vunpack.c.l.b16 %v855
    %v1124 = vunpack.c.h.b16 %v855
    %v1125 = vunpack.c.l.b16 %v856
    %v1126 = vunpack.c.h.b16 %v856
    %v1127 = vunpack.c.l.b16 %v857
    %v1128 = vunpack.c.h.b16 %v857
    %v1129 = vunpack.c.l.b16 %v858
    %v1130 = vunpack.c.h.b16 %v858
    %v1131 = vunpack.c.l.b16 %v859
    %v1132 = vunpack.c.h.b16 %v859
    %v1133 = vunpack.c.l.b16 %v860
    %v1134 = vunpack.c.h.b16 %v860
    %v1135 = vunpack.c.l.b16 %v861
    %v1136 = vunpack.c.h.b16 %v861
    %v1137 = vunpack.c.l.b16 %v862
    %v1138 = vunpack.c.h.b16 %v862
    %v1139 = vunpack.c.l.b16 %v863
    %v1140 = vunpack.c.h.b16 %v863
    %v1141 = vunpack.c.l.b16 %v864
    %v1142 = vunpack.c.h.b16 %v864
    %v1143 = vunpack.c.l.b16 %v865
    %v1144 = vunpack.c.h.b16 %v865
    %v1145 = vunpack.c.l.b16 %v866
    %v1146 = vunpack.c.h.b16 %v866
    %v1147 = vunpack.c.l.b16 %v867
    %v1148 = vunpack.c.h.b16 %v867
    %v1149 = vunpack.c.l.b16 %v868
    %v1150 = vunpack.c.h.b16 %v868
    %v1151 = vunpack.c.l.b16 %v869
    %v1152 = vunpack.c.h.b16 %v869
    %v1153 = vunpack.c.l.b16 %v870
    %v1154 = vunpack.c.h.b16 %v870
    %v1155 = vunpack.c.l.b16 %v871
    %v1156 = vunpack.c.h.b16 %v871
    %v1157 = vunpack.c.l.b16 %v872
    %v1158 = vunpack.c.h.b16 %v872
    %v1159 = vunpack.c.l.b16 %v873
    %v1160 = vunpack.c.h.b16 %v873
    %v1161 = vunpack.c.l.b16 %v874
    %v1162 = vunpack.c.h.b16 %v874
    %v1163 = vunpack.c.l.b16 %v875
    %v1164 = vunpack.c.h.b16 %v875
    %v1165 = vunpack.c.l.b16 %v876
    %v1166 = vunpack.c.h.b16 %v876
    %v1167 = vunpack.c.l.b16 %v877
    %v1168 = vunpack.c.h.b16 %v877
    %v1169 = vunpack.c.l.b16 %v878
    %v1170 = vunpack.c.h.b16 %v878
    %v1171 = vunpack.c.l.b16 %v879
    %v1172 = vunpack.c.h.b16 %v879
    %v1173 = vunpack.c.l.b16 %v880
    %v1174 = vunpack.c.h.b16 %v880
    %v1175 = vunpack.c.l.b16 %v881
    %v1176 = vunpack.c.h.b16 %v881
    %v1177 = vunpack.c.l.b16 %v882
    %v1178 = vunpack.c.h.b16 %v882
    %v1179 = vunpack.c.l.b16 %v883
    %v1180 = vunpack.c.h.b16 %v883
    %v1181 = vunpack.c.l.b16 %v884
    %v1182 = vunpack.c.h.b16 %v884
    %v1183 = vunpack.c.l.b16 %v885
    %v1184 = vunpack.c.h.b16 %v885
    %v1185 = vunpack.c.l.b16 %v886
    %v1186 = vunpack.c.h.b16 %v886
    %v1187 = vunpack.c.l.b16 %v887
    %v1188 = vunpack.c.h.b16 %v887
    %v1189 = vunpack.c.l.b16 %v888
    %v1190 = vunpack.c.h.b16 %v888
    %v1191 = vunpack.c.l.b16 %v889
    %v1192 = vunpack.c.h.b16 %v889
    %v1193 = vunpack.c.l.b16 %v890
    %v1194 = vunpack.c.h.b16 %v890
    %v1195 = vunpack.c.l.b16 %v891
    %v1196 = vunpack.c.h.b16 %v891
    %v1197 = vunpack.c.l.b16 %v892
    %v1198 = vunpack.c.h.b16 %v892
    %v1199 = vunpack.c.l.b16 %v893
    %v1200 = vunpack.c.h.b16 %v893
    %v1201 = vunpack.c.l.b16 %v894
    %v1202 = vunpack.c.h.b16 %v894
    %v1203 = vunpack.c.l.b16 %v895
    %v1204 = vunpack.c.h.b16 %v895
    %v1205 = vunpack.c.l.b16 %v896
    %v1206 = vunpack.c.h.b16 %v896
    %v1207 = vunpack.c.l.b16 %v897
    %v1208 = vunpack.c.h.b16 %v897
    %v1209 = vunpack.c.l.b16 %v898
    %v1210 = vunpack.c.h.b16 %v898
    %v1211 = vunpack.c.l.b16 %v899
    %v1212 = vunpack.c.h.b16 %v899
    %v1213 = vunpack.c.l.b16 %v900
    %v1214 = vunpack.c.h.b16 %v900
    %v1215 = vunpack.c.l.b16 %v901
    %v1216 = vunpack.c.h.b16 %v901
    %v1217 = vunpack.c.l.b16 %v902
    %v1218 = vunpack.c.h.b16 %v902
    %v1219 = vunpack.c.l.b16 %v903
    %v1220 = vunpack.c.h.b16 %v903
    %v1221 = vunpack.c.l.b16 %v904
    %v1222 = vunpack.c.h.b16 %v904
    %v1223 = vunpack.c.l.b16 %v905
    %v1224 = vunpack.c.h.b16 %v905
    %v1225 = vunpack.c.l.b16 %v906
    %v1226 = vunpack.c.h.b16 %v906
    %v1227 = vunpack.c.l.b16 %v907
    %v1228 = vunpack.c.h.b16 %v907
    %v1229 = vunpack.c.l.b16 %v908
    %v1230 = vunpack.c.h.b16 %v908
    %v1231 = vunpack.c.l.b16 %v909
    %v1232 = vunpack.c.h.b16 %v909
    %v1233 = vunpack.c.l.b16 %v910
    %v1234 = vunpack.c.h.b16 %v910
    %v1235 = vunpack.c.l.b16 %v911
    %v1236 = vunpack.c.h.b16 %v911
    %v1237 = vunpack.c.l.b16 %v912
    %v1238 = vunpack.c.h.b16 %v912
    %v1239 = vunpack.c.l.b16 %v913
    %v1240 = vunpack.c.h.b16 %v913
    %v1241 = vunpack.c.l.b16 %v914
    %v1242 = vunpack.c.h.b16 %v914
    %v1243 = vunpack.c.l.b16 %v915
    %v1244 = vunpack.c.h.b16 %v915
    %v1245 = vunpack.c.l.b16 %v916
    %v1246 = vunpack.c.h.b16 %v916
    %v1247 = vunpack.c.l.b16 %v917
    %v1248 = vunpack.c.h.b16 %v917
    %v1249 = vunpack.c.l.b16 %v918
    %v1250 = vunpack.c.h.b16 %v918
    %v1251 = vunpack.c.l.b16 %v919
    %v1252 = vunpack.c.h.b16 %v919
    %v1253 = vunpack.c.l.b16 %v920
    %v1254 = vunpack.c.h.b16 %v920
    %v1255 = vunpack.c.l.b16 %v921
    %v1256 = vunpack.c.h.b16 %v921
    %v1257 = vunpack.c.l.b16 %v922
    %v1258 = vunpack.c.h.b16 %v922
    %v1259 = vunpack.c.l.b16 %v923
    %v1260 = vunpack.c.h.b16 %v923
    %v1261 = vunpack.c.l.b16 %v924
    %v1262 = vunpack.c.h.b16 %v924
    %v1263 = vunpack.c.l.b16 %v925
    %v1264 = vunpack.c.h.b16 %v925
    %v1265 = vunpack.c.l.b16 %v926
    %v1266 = vunpack.c.h.b16 %v926
    %v1267 = vunpack.c.l.b16 %v927
    %v1268 = vunpack.c.h.b16 %v927
    %v1269 = vunpack.c.l.b16 %v928
    %v1270 = vunpack.c.h.b16 %v928
    %v1271 = vunpack.c.l.b16 %v929
    %v1272 = vunpack.c.h.b16 %v929
    %v1273 = vunpack.c.l.b16 %v930
    %v1274 = vunpack.c.h.b16 %v930
    %v1275 = vunpack.c.l.b16 %v931
    %v1276 = vunpack.c.h.b16 %v931
    %v1277 = vunpack.c.l.b16 %v932
    %v1278 = vunpack.c.h.b16 %v932
    %v1279 = vunpack.c.l.b16 %v933
    %v1280 = vunpack.c.h.b16 %v933
    %v1281 = vunpack.c.l.b16 %v934
    %v1282 = vunpack.c.h.b16 %v934
    %v1283 = vunpack.c.l.b16 %v935
    %v1284 = vunpack.c.h.b16 %v935
    %v1285 = vunpack.c.l.b16 %v936
    %v1286 = vunpack.c.h.b16 %v936
    %v1287 = vunpack.c.l.b16 %v937
    %v1288 = vunpack.c.h.b16 %v937
    %v1289 = vunpack.c.l.b16 %v938
    %v1290 = vunpack.c.h.b16 %v938
    %v1291 = vunpack.c.l.b16 %v939
    %v1292 = vunpack.c.h.b16 %v939
    %v1293 = vunpack.c.l.b16 %v940
    %v1294 = vunpack.c.h.b16 %v940
    %v1295 = vunpack.c.l.b16 %v941
    %v1296 = vunpack.c.h.b16 %v941
    %v1297 = vunpack.c.l.b16 %v942
    %v1298 = vunpack.c.h.b16 %v942
    %v1299 = vunpack.c.l.b16 %v943
    %v1300 = vunpack.c.h.b16 %v943
    %v1301 = vunpack.c.l.b16 %v944
    %v1302 = vunpack.c.h.b16 %v944
    %v1303 = vunpack.c.l.b16 %v945
    %v1304 = vunpack.c.h.b16 %v945
    %v1305 = vunpack.c.l.b16 %v946
    %v1306 = vunpack.c.h.b16 %v946
    %v1307 = vunpack.c.l.b16 %v947
    %v1308 = vunpack.c.h.b16 %v947
    %v1309 = vunpack.c.l.b16 %v948
    %v1310 = vunpack.c.h.b16 %v948
    %v1311 = vunpack.c.l.b16 %v949
    %v1312 = vunpack.c.h.b16 %v949
    %v1313 = vunpack.c.l.b16 %v950
    %v1314 = vunpack.c.h.b16 %v950
    %v1315 = vunpack.c.l.b16 %v951
    %v1316 = vunpack.c.h.b16 %v951
    %v1317 = vunpack.c.l.b16 %v952
    %v1318 = vunpack.c.h.b16 %v952
    %v1319 = vunpack.c.l.b16 %v953
    %v1320 = vunpack.c.h.b16 %v953
    %v1321 = vunpack.c.l.b16 %v954
    %v1322 = vunpack.c.h.b16 %v954
    %v1323 = vunpack.c.l.b16 %v955
    %v1324 = vunpack.c.h.b16 %v955
    %v1325 = vunpack.c.l.b16 %v956
    %v1326 = vunpack.c.h.b16 %v956
    %v1327 = vunpack.c.l.b16 %v957
    %v1328 = vunpack.c.h.b16 %v957
    %v1329 = vunpack.c.l.b16 %v958
    %v1330 = vunpack.c.h.b16 %v958
    %v1331 = vunpack.c.l.b16 %v959
    %v1332 = vunpack.c.h.b16 %v959
    %v1333 = vunpack.c.l.b16 %v960
    %v1334 = vunpack.c.h.b16 %v960
    %v1335 = vunpack.c.l.b16 %v961
    %v1336 = vunpack.c.h.b16 %v961
    %v1337 = vunpack.c.l.b16 %v962
    %v1338 = vunpack.c.h.b16 %v962
    %v1339 = vunpack.c.l.b16 %v963
    %v1340 = vunpack.c.h.b16 %v963
    %v1341 = vunpack.c.l.b16 %v964
    %v1342 = vunpack.c.h.b16 %v964
    %v1343 = vunpack.c.l.b16 %v965
    %v1344 = vunpack.c.h.b16 %v965
    %v1345 = vunpack.c.l.b16 %v966
    %v1346 = vunpack.c.h.b16 %v966
    %v1347 = vunpack.c.l.b16 %v967
    %v1348 = vunpack.c.h.b16 %v967
    %v1349 = vunpack.c.l.b16 %v968
    %v1350 = vunpack.c.h.b16 %v968
    %v1351 = vunpack.c.l.b16 %v969
    %v1352 = vunpack.c.h.b16 %v969
    %v1353 = vunpack.c.l.b16 %v970
    %v1354 = vunpack.c.h.b16 %v970
    %v1355 = vpack.c.b16 %v1101, %v1099
    %v1356 = vpack.c.b16 %v1102, %v1100
    %v1357 = vpack.c.b16 %v1105, %v1103
    %v1358 = vpack.c.b16 %v1106, %v1104
    %v1359 = vpack.c.b16 %v1109, %v1107
    %v1360 = vpack.c.b16 %v1110, %v1108
    %v1361 = vpack.c.b16 %v1113, %v1111
    %v1362 = vpack.c.b16 %v1114, %v1112
    %v1363 = vpack.c.b16 %v1117, %v1115
    %v1364 = vpack.c.b16 %v1118, %v1116
    %v1365 = vpack.c.b16 %v1121, %v1119
    %v1366 = vpack.c.b16 %v1122, %v1120
    %v1367 = vpack.c.b16 %v1125, %v1123
    %v1368 = vpack.c.b16 %v1126, %v1124
    %v1369 = vpack.c.b16 %v1129, %v1127
    %v1370 = vpack.c.b16 %v1130, %v1128
    %v1371 = vpack.c.b16 %v1133, %v1131
    %v1372 = vpack.c.b16 %v1134, %v1132
    %v1373 = vpack.c.b16 %v1137, %v1135
    %v1374 = vpack.c.b16 %v1138, %v1136
    %v1375 = vpack.c.b16 %v1141, %v1139
    %v1376 = vpack.c.b16 %v1142, %v1140
    %v1377 = vpack.c.b16 %v1145, %v1143
    %v1378 = vpack.c.b16 %v1146, %v1144
    %v1379 = vpack.c.b16 %v1149, %v1147
    %v1380 = vpack.c.b16 %v1150, %v1148
    %v1381 = vpack.c.b16 %v1153, %v1151
    %v1382 = vpack.c.b16 %v1154, %v1152
    %v1383 = vpack.c.b16 %v1157, %v1155
    %v1384 = vpack.c.b16 %v1158, %v1156
    %v1385 = vpack.c.b16 %v1161, %v1159
    %v1386 = vpack.c.b16 %v1162, %v1160
    %v1387 = vpack.c.b16 %v1165, %v1163
    %v1388 = vpack.c.b16 %v1166, %v1164
    %v1389 = vpack.c.b16 %v1169, %v1167
    %v1390 = vpack.c.b16 %v1170, %v1168
    %v1391 = vpack.c.b16 %v1173, %v1171
    %v1392 = vpack.c.b16 %v1174, %v1172
    %v1393 = vpack.c.b16 %v1177, %v1175
    %v1394 = vpack.c.b16 %v1178, %v1176
    %v1395 = vpack.c.b16 %v1181, %v1179
    %v1396 = vpack.c.b16 %v1182, %v1180
    %v1397 = vpack.c.b16 %v1185, %v1183
    %v1398 = vpack.c.b16 %v1186, %v1184
    %v1399 = vpack.c.b16 %v1189, %v1187
    %v1400 = vpack.c.b16 %v1190, %v1188
    %v1401 = vpack.c.b16 %v1193, %v1191
    %v1402 = vpack.c.b16 %v1194, %v1192
    %v1403 = vpack.c.b16 %v1197, %v1195
    %v1404 = vpack.c.b16 %v1198, %v1196
    %v1405 = vpack.c.b16 %v1201, %v1199
    %v1406 = vpack.c.b16 %v1202, %v1200
    %v1407 = vpack.c.b16 %v1205, %v1203
    %v1408 = vpack.c.b16 %v1206, %v1204
    %v1409 = vpack.c.b16 %v1209, %v1207
    %v1410 = vpack.c.b16 %v1210, %v1208
    %v1411 = vpack.c.b16 %v1213, %v1211
    %v1412 = vpack.c.b16 %v1214, %v1212
    %v1413 = vpack.c.b16 %v1217, %v1215
    %v1414 = vpack.c.b16 %v1218, %v1216
    %v1415 = vpack.c.b16 %v1221, %v1219
    %v1416 = vpack.c.b16 %v1222, %v1220
    %v1417 = vpack.c.b16 %v1225, %v1223
    %v1418 = vpack.c.b16 %v1226, %v1224
    %v1419 = vpack.c.b16 %v1229, %v1227
    %v1420 = vpack.c.b16 %v1230, %v1228
    %v1421 = vpack.c.b16 %v1233, %v1231
    %v1422 = vpack.c.b16 %v1234, %v1232
    %v1423 = vpack.c.b16 %v1237, %v1235
    %v1424 = vpack.c.b16 %v1238, %v1236
    %v1425 = vpack.c.b16 %v1241, %v1239
    %v1426 = vpack.c.b16 %v1242, %v1240
    %v1427 = vpack.c.b16 %v1245, %v1243
    %v1428 = vpack.c.b16 %v1246, %v1244
    %v1429 = vpack.c.b16 %v1249, %v1247
    %v1430 = vpack.c.b16 %v1250, %v1248
    %v1431 = vpack.c.b16 %v1253, %v1251
    %v1432 = vpack.c.b16 %v1254, %v1252
    %v1433 = vpack.c.b16 %v1257, %v1255
    %v1434 = vpack.c.b16 %v1258, %v1256
    %v1435 = vpack.c.b16 %v1261, %v1259
    %v1436 = vpack.c.b16 %v1262, %v1260
    %v1437 = vpack.c.b16 %v1265, %v1263
    %v1438 = vpack.c.b16 %v1266, %v1264
    %v1439 = vpack.c.b16 %v1269, %v1267
    %v1440 = vpack.c.b16 %v1270, %v1268
    %v1441 = vpack.c.b16 %v1273, %v1271
    %v1442 = vpack.c.b16 %v1274, %v1272
    %v1443 = vpack.c.b16 %v1277, %v1275
    %v1444 = vpack.c.b16 %v1278, %v1276
    %v1445 = vpack.c.b16 %v1281, %v1279
    %v1446 = vpack.c.b16 %v1282, %v1280
    %v1447 = vpack.c.b16 %v1285, %v1283
    %v1448 = vpack.c.b16 %v1286, %v1284
    %v1449 = vpack.c.b16 %v1289, %v1287
    %v1450 = vpack.c.b16 %v1290, %v1288
    %v1451 = vpack.c.b16 %v1293, %v1291
    %v1452 = vpack.c.b16 %v1294, %v1292
    %v1453 = vpack.c.b16 %v1297, %v1295
    %v1454 = vpack.c.b16 %v1298, %v1296
    %v1455 = vpack.c.b16 %v1301, %v1299
    %v1456 = vpack.c.b16 %v1302, %v1300
    %v1457 = vpack.c.b16 %v1305, %v1303
    %v1458 = vpack.c.b16 %v1306, %v1304
    %v1459 = vpack.c.b16 %v1309, %v1307
    %v1460 = vpack.c.b16 %v1310, %v1308
    %v1461 = vpack.c.b16 %v1313, %v1311
    %v1462 = vpack.c.b16 %v1314, %v1312
    %v1463 = vpack.c.b16 %v1317, %v1315
    %v1464 = vpack.c.b16 %v1318, %v1316
    %v1465 = vpack.c.b16 %v1321, %v1319
    %v1466 = vpack.c.b16 %v1322, %v1320
    %v1467 = vpack.c.b16 %v1325, %v1323
    %v1468 = vpack.c.b16 %v1326, %v1324
    %v1469 = vpack.c.b16 %v1329, %v1327
    %v1470 = vpack.c.b16 %v1330, %v1328
    %v1471 = vpack.c.b16 %v1333, %v1331
    %v1472 = vpack.c.b16 %v1334, %v1332
    %v1473 = vpack.c.b16 %v1337, %v1335
    %v1474 = vpack.c.b16 %v1338, %v1336
    %v1475 = vpack.c.b16 %v1341, %v1339
    %v1476 = vpack.c.b16 %v1342, %v1340
    %v1477 = vpack.c.b16 %v1345, %v1343
    %v1478 = vpack.c.b16 %v1346, %v1344
    %v1479 = vpack.c.b16 %v1349, %v1347
    %v1480 = vpack.c.b16 %v1350, %v1348
    %v1481 = vpack.c.b16 %v1353, %v1351
    %v1482 = vpack.c.b16 %v1354, %v1352
    %1611 = vmatprep.subr.bf16.mxu0 %v1356
    %1612 = vmatpush1.bf16.msra.mxu0 %v1355
    %1613 = vmatprep.subr.bf16.mxu0 %v1358
    %1614 = vmatpush1.bf16.msra.mxu0 %v1357
    %1615 = vmatprep.subr.bf16.mxu0 %v1360
    %1616 = vmatpush1.bf16.msra.mxu0 %v1359
    %1617 = vmatprep.subr.bf16.mxu0 %v1362
    %1618 = vmatpush1.bf16.msra.mxu0 %v1361
    %1619 = vmatprep.subr.bf16.mxu0 %v1364
    %1620 = vmatpush1.bf16.msra.mxu0 %v1363
    %1621 = vmatprep.subr.bf16.mxu0 %v1366
    %1622 = vmatpush1.bf16.msra.mxu0 %v1365
    %1623 = vmatprep.subr.bf16.mxu0 %v1368
    %1624 = vmatpush1.bf16.msra.mxu0 %v1367
    %1625 = vmatprep.subr.bf16.mxu0 %v1370
    %1626 = vmatpush1.bf16.msra.mxu0 %v1369
    %1627 = vmatprep.subr.bf16.mxu0 %v1372
    %1628 = vmatpush1.bf16.msra.mxu0 %v1371
    %1629 = vmatprep.subr.bf16.mxu0 %v1374
    %1630 = vmatpush1.bf16.msra.mxu0 %v1373
    %1631 = vmatprep.subr.bf16.mxu0 %v1376
    %1632 = vmatpush1.bf16.msra.mxu0 %v1375
    %1633 = vmatprep.subr.bf16.mxu0 %v1378
    %1634 = vmatpush1.bf16.msra.mxu0 %v1377
    %1635 = vmatprep.subr.bf16.mxu0 %v1380
    %1636 = vmatpush1.bf16.msra.mxu0 %v1379
    %1637 = vmatprep.subr.bf16.mxu0 %v1382
    %1638 = vmatpush1.bf16.msra.mxu0 %v1381
    %1639 = vmatprep.subr.bf16.mxu0 %v1384
    %1640 = vmatpush1.bf16.msra.mxu0 %v1383
    %1641 = vmatprep.subr.bf16.mxu0 %v1386
    %1642 = vmatpush1.bf16.msra.mxu0 %v1385
    %1643 = vmatprep.mubr.bf16.mxu0 %v836
    %1644 = vmatmul.mubr.bf16.gmra.mrb[0].mxu0 %v835
    %v1645 = vpop.f32.mrb[0].mxu0
    %v1646 = vadd.f32 0.0, %v1645
    %v1647 = vpop.f32.mrb[0].mxu0
    %v1648 = vadd.f32 0.0, %v1647
    %v1649 = vpop.f32.mrb[0].mxu0
    %v1650 = vadd.f32 0.0, %v1649
    %v1651 = vpop.f32.mrb[0].mxu0
    %v1652 = vadd.f32 0.0, %v1651
    %1653 = vdwg.mxu0
    %1654 = vmatprep.subr.bf16.mxu0 %v1388
    %1655 = vmatpush1.bf16.msra.mxu0 %v1387
    %1656 = vmatprep.subr.bf16.mxu0 %v1390
    %1657 = vmatpush1.bf16.msra.mxu0 %v1389
    %1658 = vmatprep.subr.bf16.mxu0 %v1392
    %1659 = vmatpush1.bf16.msra.mxu0 %v1391
    %1660 = vmatprep.subr.bf16.mxu0 %v1394
    %1661 = vmatpush1.bf16.msra.mxu0 %v1393
    %1662 = vmatprep.subr.bf16.mxu0 %v1396
    %1663 = vmatpush1.bf16.msra.mxu0 %v1395
    %1664 = vmatprep.subr.bf16.mxu0 %v1398
    %1665 = vmatpush1.bf16.msra.mxu0 %v1397
    %1666 = vmatprep.subr.bf16.mxu0 %v1400
    %1667 = vmatpush1.bf16.msra.mxu0 %v1399
    %1668 = vmatprep.subr.bf16.mxu0 %v1402
    %1669 = vmatpush1.bf16.msra.mxu0 %v1401
    %1670 = vmatprep.subr.bf16.mxu0 %v1404
    %1671 = vmatpush1.bf16.msra.mxu0 %v1403
    %1672 = vmatprep.subr.bf16.mxu0 %v1406
    %1673 = vmatpush1.bf16.msra.mxu0 %v1405
    %1674 = vmatprep.subr.bf16.mxu0 %v1408
    %1675 = vmatpush1.bf16.msra.mxu0 %v1407
    %1676 = vmatprep.subr.bf16.mxu0 %v1410
    %1677 = vmatpush1.bf16.msra.mxu0 %v1409
    %1678 = vmatprep.subr.bf16.mxu0 %v1412
    %1679 = vmatpush1.bf16.msra.mxu0 %v1411
    %1680 = vmatprep.subr.bf16.mxu0 %v1414
    %1681 = vmatpush1.bf16.msra.mxu0 %v1413
    %1682 = vmatprep.subr.bf16.mxu0 %v1416
    %1683 = vmatpush1.bf16.msra.mxu0 %v1415
    %1684 = vmatprep.subr.bf16.mxu0 %v1418
    %1685 = vmatpush1.bf16.msra.mxu0 %v1417
    %1686 = vmatprep.mubr.bf16.mxu0 %v838
    %1687 = vmatmul.mubr.bf16.gmra.mrb[0].mxu0 %v837
    %v1688 = vpop.f32.mrb[0].mxu0
    %v1689 = vadd.f32 %v1646, %v1688
    %v1690 = vpop.f32.mrb[0].mxu0
    %v1691 = vadd.f32 %v1648, %v1690
    %v1692 = vpop.f32.mrb[0].mxu0
    %v1693 = vadd.f32 %v1650, %v1692
    %v1694 = vpop.f32.mrb[0].mxu0
    %v1695 = vadd.f32 %v1652, %v1694
    %1696 = vdwg.mxu0
    %1697 = vmatprep.subr.bf16.mxu0 %v1420
    %1698 = vmatpush1.bf16.msra.mxu0 %v1419
    %1699 = vmatprep.subr.bf16.mxu0 %v1422
    %1700 = vmatpush1.bf16.msra.mxu0 %v1421
    %1701 = vmatprep.subr.bf16.mxu0 %v1424
    %1702 = vmatpush1.bf16.msra.mxu0 %v1423
    %1703 = vmatprep.subr.bf16.mxu0 %v1426
    %1704 = vmatpush1.bf16.msra.mxu0 %v1425
    %1705 = vmatprep.subr.bf16.mxu0 %v1428
    %1706 = vmatpush1.bf16.msra.mxu0 %v1427
    %1707 = vmatprep.subr.bf16.mxu0 %v1430
    %1708 = vmatpush1.bf16.msra.mxu0 %v1429
    %1709 = vmatprep.subr.bf16.mxu0 %v1432
    %1710 = vmatpush1.bf16.msra.mxu0 %v1431
    %1711 = vmatprep.subr.bf16.mxu0 %v1434
    %1712 = vmatpush1.bf16.msra.mxu0 %v1433
    %1713 = vmatprep.subr.bf16.mxu0 %v1436
    %1714 = vmatpush1.bf16.msra.mxu0 %v1435
    %1715 = vmatprep.subr.bf16.mxu0 %v1438
    %1716 = vmatpush1.bf16.msra.mxu0 %v1437
    %1717 = vmatprep.subr.bf16.mxu0 %v1440
    %1718 = vmatpush1.bf16.msra.mxu0 %v1439
    %1719 = vmatprep.subr.bf16.mxu0 %v1442
    %1720 = vmatpush1.bf16.msra.mxu0 %v1441
    %1721 = vmatprep.subr.bf16.mxu0 %v1444
    %1722 = vmatpush1.bf16.msra.mxu0 %v1443
    %1723 = vmatprep.subr.bf16.mxu0 %v1446
    %1724 = vmatpush1.bf16.msra.mxu0 %v1445
    %1725 = vmatprep.subr.bf16.mxu0 %v1448
    %1726 = vmatpush1.bf16.msra.mxu0 %v1447
    %1727 = vmatprep.subr.bf16.mxu0 %v1450
    %1728 = vmatpush1.bf16.msra.mxu0 %v1449
    %1729 = vmatprep.mubr.bf16.mxu0 %v840
    %1730 = vmatmul.mubr.bf16.gmra.mrb[0].mxu0 %v839
    %v1731 = vpop.f32.mrb[0].mxu0
    %v1732 = vadd.f32 %v1689, %v1731
    %v1733 = vpop.f32.mrb[0].mxu0
    %v1734 = vadd.f32 %v1691, %v1733
    %v1735 = vpop.f32.mrb[0].mxu0
    %v1736 = vadd.f32 %v1693, %v1735
    %v1737 = vpop.f32.mrb[0].mxu0
    %v1738 = vadd.f32 %v1695, %v1737
    %1739 = vdwg.mxu0
    %1740 = vmatprep.subr.bf16.mxu0 %v1452
    %1741 = vmatpush1.bf16.msra.mxu0 %v1451
    %1742 = vmatprep.subr.bf16.mxu0 %v1454
    %1743 = vmatpush1.bf16.msra.mxu0 %v1453
    %1744 = vmatprep.subr.bf16.mxu0 %v1456
    %1745 = vmatpush1.bf16.msra.mxu0 %v1455
    %1746 = vmatprep.subr.bf16.mxu0 %v1458
    %1747 = vmatpush1.bf16.msra.mxu0 %v1457
    %1748 = vmatprep.subr.bf16.mxu0 %v1460
    %1749 = vmatpush1.bf16.msra.mxu0 %v1459
    %1750 = vmatprep.subr.bf16.mxu0 %v1462
    %1751 = vmatpush1.bf16.msra.mxu0 %v1461
    %1752 = vmatprep.subr.bf16.mxu0 %v1464
    %1753 = vmatpush1.bf16.msra.mxu0 %v1463
    %1754 = vmatprep.subr.bf16.mxu0 %v1466
    %1755 = vmatpush1.bf16.msra.mxu0 %v1465
    %1756 = vmatprep.subr.bf16.mxu0 %v1468
    %1757 = vmatpush1.bf16.msra.mxu0 %v1467
    %1758 = vmatprep.subr.bf16.mxu0 %v1470
    %1759 = vmatpush1.bf16.msra.mxu0 %v1469
    %1760 = vmatprep.subr.bf16.mxu0 %v1472
    %1761 = vmatpush1.bf16.msra.mxu0 %v1471
    %1762 = vmatprep.subr.bf16.mxu0 %v1474
    %1763 = vmatpush1.bf16.msra.mxu0 %v1473
    %1764 = vmatprep.subr.bf16.mxu0 %v1476
    %1765 = vmatpush1.bf16.msra.mxu0 %v1475
    %1766 = vmatprep.subr.bf16.mxu0 %v1478
    %1767 = vmatpush1.bf16.msra.mxu0 %v1477
    %1768 = vmatprep.subr.bf16.mxu0 %v1480
    %1769 = vmatpush1.bf16.msra.mxu0 %v1479
    %1770 = vmatprep.subr.bf16.mxu0 %v1482
    %1771 = vmatpush1.bf16.msra.mxu0 %v1481
    %1772 = vmatprep.mubr.bf16.mxu0 %v842
    %1773 = vmatmul.mubr.bf16.gmra.mrb[0].mxu0 %v841
    %v1774 = vpop.f32.mrb[0].mxu0
    %v1775 = vadd.f32 %v1732, %v1774
    %v1776 = vpop.f32.mrb[0].mxu0
    %v1777 = vadd.f32 %v1734, %v1776
    %v1778 = vpop.f32.mrb[0].mxu0
    %v1779 = vadd.f32 %v1736, %v1778
    %v1780 = vpop.f32.mrb[0].mxu0
    %v1781 = vadd.f32 %v1738, %v1780
    %1782 = vdwg.mxu0
    %s1783 = sld [smem:[#allocation4]]
    %v1784 = vstv %s1783
    %v1785 = vadd.f32 %v1775, %v1784
    %v1786 = vadd.f32 %v1777, %v1784
    %v1787 = vmax.f32 %v1785, 0.0
    %v1788 = vmax.f32 %v1786, 0.0
    %s1789 = sld [smem:[#allocation8]]
    %v1790 = vstv %s1789
    %v1791 = vmul.f32 %v1787, %v1790
    %v1792 = vmul.f32 %v1788, %v1790
    %s1793 = sld [smem:[#allocation8 + $0x1]]
    %s1794 = sld [smem:[#allocation4 + $0x1]]
    %v1795 = vstv %s1794
    %v1796 = vadd.f32 %v1775, %v1795
    %v1797 = vadd.f32 %v1777, %v1795
    %v1798 = vmax.f32 %v1796, 0.0
    %v1799 = vmax.f32 %v1797, 0.0
    %v1800 = vstv %s1793
    %v1801 = vmul.f32 %v1798, %v1800
    %v1802 = vmul.f32 %v1799, %v1800
    %v1805 = vrot.slane %v1801, 2
    %v1806 = vrot.slane %v1802, 2
    %v1809 = vadd.f32 %v1791, %v1805
    %v1810 = vadd.f32 %v1792, %v1806
    %s1811 = sld [smem:[#allocation8 + $0x2]]
    %s1812 = sld [smem:[#allocation4 + $0x2]]
    %v1813 = vstv %s1812
    %v1814 = vadd.f32 %v1775, %v1813
    %v1815 = vadd.f32 %v1777, %v1813
    %v1816 = vmax.f32 %v1814, 0.0
    %v1817 = vmax.f32 %v1815, 0.0
    %v1818 = vstv %s1811
    %v1819 = vmul.f32 %v1816, %v1818
    %v1820 = vmul.f32 %v1817, %v1818
    %v1823 = vrot.slane %v1819, 4
    %v1824 = vrot.slane %v1820, 4
    %v1827 = vadd.f32 %v1809, %v1823
    %v1828 = vadd.f32 %v1810, %v1824
    %s1829 = sld [smem:[#allocation8 + $0x3]]
    %s1830 = sld [smem:[#allocation4 + $0x3]]
    %v1831 = vstv %s1830
    %v1832 = vadd.f32 %v1775, %v1831
    %v1833 = vadd.f32 %v1777, %v1831
    %v1834 = vmax.f32 %v1832, 0.0
    %v1835 = vmax.f32 %v1833, 0.0
    %v1836 = vstv %s1829
    %v1837 = vmul.f32 %v1834, %v1836
    %v1838 = vmul.f32 %v1835, %v1836
    %v1841 = vrot.slane %v1837, 6
    %v1842 = vrot.slane %v1838, 6
    %v1845 = vadd.f32 %v1827, %v1841
    %v1846 = vadd.f32 %v1828, %v1842
    %s1847 = sld [smem:[#allocation8 + $0x4]]
    %s1848 = sld [smem:[#allocation4 + $0x4]]
    %v1849 = vstv %s1848
    %v1850 = vadd.f32 %v1779, %v1849
    %v1851 = vadd.f32 %v1781, %v1849
    %v1852 = vmax.f32 %v1850, 0.0
    %v1853 = vmax.f32 %v1851, 0.0
    %v1854 = vstv %s1847
    %v1855 = vmul.f32 %v1852, %v1854
    %v1856 = vmul.f32 %v1853, %v1854
    %v1857 = vadd.f32 %v1845, %v1855
    %v1858 = vadd.f32 %v1846, %v1856
    %s1859 = sld [smem:[#allocation8 + $0x5]]
    %s1860 = sld [smem:[#allocation4 + $0x5]]
    %v1861 = vstv %s1860
    %v1862 = vadd.f32 %v1779, %v1861
    %v1863 = vadd.f32 %v1781, %v1861
    %v1864 = vmax.f32 %v1862, 0.0
    %v1865 = vmax.f32 %v1863, 0.0
    %v1866 = vstv %s1859
    %v1867 = vmul.f32 %v1864, %v1866
    %v1868 = vmul.f32 %v1865, %v1866
    %v1871 = vrot.slane %v1867, 2
    %v1872 = vrot.slane %v1868, 2
    %v1875 = vadd.f32 %v1857, %v1871
    %v1876 = vadd.f32 %v1858, %v1872
    %s1877 = sld [smem:[#allocation8 + $0x6]]
    %s1878 = sld [smem:[#allocation4 + $0x6]]
    %v1879 = vstv %s1878
    %v1880 = vadd.f32 %v1779, %v1879
    %v1881 = vadd.f32 %v1781, %v1879
    %v1882 = vmax.f32 %v1880, 0.0
    %v1883 = vmax.f32 %v1881, 0.0
    %v1884 = vstv %s1877
    %v1885 = vmul.f32 %v1882, %v1884
    %v1886 = vmul.f32 %v1883, %v1884
    %v1889 = vrot.slane %v1885, 4
    %v1890 = vrot.slane %v1886, 4
    %v1893 = vadd.f32 %v1875, %v1889
    %v1894 = vadd.f32 %v1876, %v1890
    %s1895 = sld [smem:[#allocation8 + $0x7]]
    %s1896 = sld [smem:[#allocation4 + $0x7]]
    %v1897 = vstv %s1896
    %v1898 = vadd.f32 %v1779, %v1897
    %v1899 = vadd.f32 %v1781, %v1897
    %v1900 = vmax.f32 %v1898, 0.0
    %v1901 = vmax.f32 %v1899, 0.0
    %v1902 = vstv %s1895
    %v1903 = vmul.f32 %v1900, %v1902
    %v1904 = vmul.f32 %v1901, %v1902
    %v1907 = vrot.slane %v1903, 6
    %v1908 = vrot.slane %v1904, 6
    %v1911 = vadd.f32 %v1893, %v1907
    %v1912 = vadd.f32 %v1894, %v1908
    %s1913 = sld [smem:[#allocation3]]
    %v1914 = vstv %s1913
    %v1915 = vadd.f32 %v1911, %v1914
    %v1916 = vadd.f32 %v1912, %v1914
    %v1917 = vmax.f32 %v1915, 0.0
    %v1918 = vmax.f32 %v1916, 0.0
    %v1921 = vcombine.low %v1917, %v1918
    %v1923 = vunpack.c.l.s4 1983009808
    %v1924 = vunpack.c.0.s8 %v1923
    %v1925 = vlaneseq
    %v1926 = vshrl.u32 %v1925, 7
    %v1927 = vsub.s32 %v1924, %v1926
    %v1928 = vrot.slane %v1921, %v1927
    %1930 = vst [vmem:[#allocation13] sm:$0xf] %v1928
    // Predicated region
    $region42: #{tpu_custom_call.1} parent=1 // pred_check
      _
    $region43: #{tpu_custom_call.1} parent=1 // pred_check_branch
      %1932 = sbr.rel (0) target = $region45
    $region44: #{tpu_custom_call.1} parent=1 // pred_region
      %s1934 = ssub.s32 64, 64
      %1935 = vsyncadd [#allocation6], %s1934
      %s1937 = sshll.u32 [#allocation13], 4
      %s1938 = int_to_ptr.vmem [resolvable:$true] %s1937
      %1940 = dma.vmem_to_hbm [thread:$0]  %s1938, 64, %s6, [#allocation6]
    $region45: #{tpu_custom_call.1} parent=1 // pred_fallthru
      _
    // Predicated region
    $region46: #{tpu_custom_call.1} parent=1 // pred_check
      _
    $region47: #{tpu_custom_call.1} parent=1 // pred_check_branch
      %1942 = sbr.rel (0) target = $region49
    $region48: #{tpu_custom_call.1} parent=1 // pred_region
      %1943 = dma.done [#allocation6], 64
    $region49: #{tpu_custom_call.1} parent=1 // pred_fallthru
      _
    %1944 = vsyncpa [#allocation5], 1
    %1945 = vsyncpa [#allocation12], 1
    %1946 = vsyncpa [#allocation6], 1
    %1947 = vsyncpa [#allocation7], 1
    %1948 = vsyncpa [#allocation9], 1

</llo_original>
